<compile_context>
chip_gen: v7x
topology: tpu7x:2x2x1
jax: 0.10.0
libtpu: 0.0.40
codegen_flags: <defaults>
</compile_context>

<pallas_src>
import functools

import jax
import jax.numpy as jnp
from jax.experimental import pallas as pl
from jax.experimental.pallas import tpu as pltpu


N, K, M = 6, 6, 3
NK = N * K                     # 36
HIDDEN = 300
HIDDEN_P = 384                 # 3 * 128 (lane-dense padded hidden; weights-only pad)
IMAGE_SIZE = 784               # true output width (6*128 + 16; last lane group masked)

# Sublane granularity for the batch tile: 16 covers both f32 (needs 8) and bf16
# (packed sublanes, needs 16) output blocks; the ragged edge block handles the rest.
_TILE_GRAN = 16


def _round_up(x, m):
    return ((x + m - 1) // m) * m


@functools.lru_cache(maxsize=1)
def _num_tensorcores():
    """Best-effort TensorCore-per-chip count (v7x=2, v5e/v6e=1). Falls back to 1."""
    try:
        info = pltpu.get_tpu_info()
        for attr in ("num_cores", "num_tensorcores", "tensorcore_count",
                     "cores_per_chip"):
            n = getattr(info, attr, None)
            if isinstance(n, int) and n > 0:
                return n
    except Exception:
        pass
    return 1


def _choose_tile(batch, tb, num_cores):
    # Cap the tile so the grid has >= num_cores steps on multi-TC chips (megacore
    # sharding via dimension_semantics=("parallel",)); on 1-TC chips keep a single
    # big tile whenever the batch fits (extra grid steps are pure serial overhead).
    if num_cores > 1 and batch > _TILE_GRAN * num_cores:
        cap = _round_up(pl.cdiv(batch, num_cores), _TILE_GRAN)
    else:
        cap = _round_up(batch, _TILE_GRAN)
    return max(_TILE_GRAN, min(tb, cap))


def decoder_kernel(y_ref, w1_ref, b1_ref, w2_ref, b2_ref, out_ref):
    # y_ref:   (tb, NK)            f32  batch tile of the flattened latent
    # w1_ref:  (NK, HIDDEN_P)      bf16   b1_ref: (1, HIDDEN_P)   f32
    # w2_ref:  (HIDDEN_P, IMAGE)   bf16   b2_ref: (1, IMAGE)      f32
    # out_ref: (tb, IMAGE)         bf16 (or f32)
    #
    # Rows of the (ragged) edge block beyond `batch` contain undefined data; that is
    # safe because there is no cross-row reduction and Pallas masks the edge output.
    y = y_ref[...].astype(jnp.bfloat16)                       # bf16 MXU operands
    h = jnp.dot(y, w1_ref[...], preferred_element_type=jnp.float32)
    h = jnp.maximum(h + b1_ref[...], 0.0)                     # bias + ReLU on the VPU
    o = jnp.dot(h.astype(jnp.bfloat16), w2_ref[...],
                preferred_element_type=jnp.float32)           # f32 accumulation
    out_ref[...] = (o + b2_ref[...]).astype(out_ref.dtype)


def prepare_params(w1, b1, w2, b2):
    """One-time padding + bf16 cast of the weights (keep off the per-call path).

    w1: (NK, HIDDEN) f32, b1: (1, HIDDEN), w2: (HIDDEN, IMAGE_SIZE), b2: (1, IMAGE_SIZE)
    Padded hidden rows/cols are zero, so the math is unchanged.
    """
    w1_p = jnp.zeros((NK, HIDDEN_P), jnp.bfloat16).at[:, :HIDDEN].set(
        jnp.asarray(w1, jnp.bfloat16))
    b1_p = jnp.zeros((1, HIDDEN_P), jnp.float32).at[:, :HIDDEN].set(
        jnp.asarray(b1, jnp.float32).reshape(1, HIDDEN))
    w2_p = jnp.zeros((HIDDEN_P, IMAGE_SIZE), jnp.bfloat16).at[:HIDDEN, :].set(
        jnp.asarray(w2, jnp.bfloat16))
    b2_p = jnp.asarray(b2, jnp.float32).reshape(1, IMAGE_SIZE)
    return w1_p, b1_p, w2_p, b2_p


@functools.partial(jax.jit, static_argnames=("tb", "out_dtype"))
def decoder_forward(y, w1_p, b1_p, w2_p, b2_p, *, tb=512, out_dtype=jnp.bfloat16):
    # Mirrors: out = Linear(300, 784)(ReLU(Linear(N*K, 300)(y.view(-1, N*K))))
    y2 = y.reshape(-1, NK)                       # y.view(-1, N*K); free layout reinterpret
    batch = y2.shape[0]

    tb_eff = _choose_tile(batch, tb, _num_tensorcores())
    grid = (pl.cdiv(batch, tb_eff),)             # ragged edge handled by Pallas masking

    out_itemsize = jnp.dtype(out_dtype).itemsize
    cost = pl.CostEstimate(
        flops=2 * batch * (NK * HIDDEN_P + HIDDEN_P * IMAGE_SIZE),
        transcendentals=0,
        bytes_accessed=(batch * NK * y2.dtype.itemsize
                        + batch * IMAGE_SIZE * out_itemsize
                        + w1_p.size * 2 + b1_p.size * 4
                        + w2_p.size * 2 + b2_p.size * 4),
    )

    return pl.pallas_call(
        decoder_kernel,
        out_shape=jax.ShapeDtypeStruct((batch, IMAGE_SIZE), out_dtype),
        grid=grid,
        in_specs=[
            pl.BlockSpec((tb_eff, NK), lambda i: (i, 0)),          # batch-tiled input
            pl.BlockSpec((NK, HIDDEN_P), lambda i: (0, 0)),        # resident weights
            pl.BlockSpec((1, HIDDEN_P), lambda i: (0, 0)),
            pl.BlockSpec((HIDDEN_P, IMAGE_SIZE), lambda i: (0, 0)),
            pl.BlockSpec((1, IMAGE_SIZE), lambda i: (0, 0)),
        ],
        out_specs=pl.BlockSpec((tb_eff, IMAGE_SIZE), lambda i: (i, 0)),
        compiler_params=pltpu.CompilerParams(
            dimension_semantics=("parallel",)                      # megacore on v7x
        ),
        cost_estimate=cost,
    )(y2, w1_p, b1_p, w2_p, b2_p)


def init_params(key):
    # Deterministic init matching PyTorch nn.Linear default:
    # U(-1/sqrt(fan_in), 1/sqrt(fan_in)) for weight and bias.
    k1, k2, k3, k4 = jax.random.split(key, 4)
    bound1 = 1.0 / jnp.sqrt(jnp.float32(NK))
    bound2 = 1.0 / jnp.sqrt(jnp.float32(HIDDEN))
    w1 = jax.random.uniform(k1, (NK, HIDDEN), jnp.float32, -bound1, bound1)
    b1 = jax.random.uniform(k2, (1, HIDDEN), jnp.float32, -bound1, bound1)
    w2 = jax.random.uniform(k3, (HIDDEN, IMAGE_SIZE), jnp.float32, -bound2, bound2)
    b2 = jax.random.uniform(k4, (1, IMAGE_SIZE), jnp.float32, -bound2, bound2)
    return w1, b1, w2, b2


if __name__ == "__main__":
    key = jax.random.PRNGKey(0)
    kp, ky = jax.random.split(key)
    w1, b1, w2, b2 = init_params(kp)

    # One-time param prep (padding + bf16 cast) — off the per-call critical path.
    params = prepare_params(w1, b1, w2, b2)

    # Deliberately not a multiple of the tile: with tb=128 this gives a 2-step
    # ragged grid (exercises edge masking and the megacore-parallel path).
    batch = 200
    y = jax.random.uniform(ky, (batch, N, K), jnp.float32)

    out = jax.block_until_ready(decoder_forward(y, *params, tb=128))
    # Default tile: single big block on 1-TC chips, split across cores on v7x.
    out_big = jax.block_until_ready(decoder_forward(y, *params))

    # Reference check in plain f32 JAX (same math). bf16 MXU operands + bf16
    # output -> loosened tolerance.
    ref = jnp.maximum(y.reshape(-1, NK) @ w1 + b1, 0.0) @ w2 + b2
    assert out.shape == (batch, IMAGE_SIZE)
    assert out_big.shape == (batch, IMAGE_SIZE)
    err = float(jnp.max(jnp.abs(out.astype(jnp.float32) - ref)))
    err_big = float(jnp.max(jnp.abs(out_big.astype(jnp.float32) - ref)))
    assert err < 1e-1, f"max abs err {err}"
    assert err_big < 1e-1, f"max abs err {err_big}"

    print("KERNEL_OK")
</pallas_src>

<mosaic_0001>
module attributes {stable_mosaic.version = 11 : i64} {
  func.func @decoder_kernel(%arg0: i32, %arg1: memref<128x36xf32, #tpu.memory_space<vmem>>, %arg2: memref<36x384xbf16, #tpu.memory_space<vmem>>, %arg3: memref<1x384xf32, #tpu.memory_space<vmem>>, %arg4: memref<384x784xbf16, #tpu.memory_space<vmem>>, %arg5: memref<1x784xf32, #tpu.memory_space<vmem>>, %arg6: memref<128x784xbf16, #tpu.memory_space<vmem>>) attributes {dimension_semantics = [#tpu.dimension_semantics<parallel>], iteration_bounds = array<i64: 2>, scalar_prefetch = 0 : i64, scratch_operands = 0 : i64, tpu.core_type = #tpu.core_type<tc>, window_params = [{transform_indices = @transform_0, window_bounds = array<i64: 128, 36>}, {pipeline_mode = #tpu.pipeline_mode<synchronous>, transform_indices = @transform_1, window_bounds = array<i64: 36, 384>}, {pipeline_mode = #tpu.pipeline_mode<synchronous>, transform_indices = @transform_2, window_bounds = array<i64: 1, 384>}, {pipeline_mode = #tpu.pipeline_mode<synchronous>, transform_indices = @transform_3, window_bounds = array<i64: 384, 784>}, {pipeline_mode = #tpu.pipeline_mode<synchronous>, transform_indices = @transform_4, window_bounds = array<i64: 1, 784>}, {transform_indices = @transform_5, window_bounds = array<i64: 128, 784>}]} {
    %c0 = arith.constant 0 : index
    %c0_0 = arith.constant 0 : index
    %0 = vector.load %arg1[%c0, %c0_0] : memref<128x36xf32, #tpu.memory_space<vmem>>, vector<128x36xf32>
    %1 = arith.truncf %0 : vector<128x36xf32> to vector<128x36xbf16>
    %c0_1 = arith.constant 0 : index
    %c0_2 = arith.constant 0 : index
    %2 = vector.load %arg2[%c0_1, %c0_2] : memref<36x384xbf16, #tpu.memory_space<vmem>>, vector<36x384xbf16>
    %cst = arith.constant dense<0.000000e+00> : vector<128x384xf32>
    %3 = tpu.matmul %1, %2, %cst {dimension_numbers = #tpu.dot_dimension_numbers<[1], [0], [0], [1], [0, 0, 1, 1], [], []>} : vector<128x36xbf16>, vector<36x384xbf16>, vector<128x384xf32> -> vector<128x384xf32>
    %c0_3 = arith.constant 0 : index
    %c0_4 = arith.constant 0 : index
    %4 = vector.load %arg3[%c0_3, %c0_4] : memref<1x384xf32, #tpu.memory_space<vmem>>, vector<1x384xf32>
    %5 = vector.broadcast %4 : vector<1x384xf32> to vector<128x384xf32>
    %6 = arith.addf %3, %5 : vector<128x384xf32>
    %cst_5 = arith.constant 0.000000e+00 : f32
    %7 = vector.broadcast %cst_5 : f32 to vector<128x384xf32>
    %8 = arith.maximumf %6, %7 : vector<128x384xf32>
    %9 = arith.truncf %8 : vector<128x384xf32> to vector<128x384xbf16>
    %c0_6 = arith.constant 0 : index
    %c0_7 = arith.constant 0 : index
    %10 = vector.load %arg4[%c0_6, %c0_7] : memref<384x784xbf16, #tpu.memory_space<vmem>>, vector<384x784xbf16>
    %cst_8 = arith.constant dense<0.000000e+00> : vector<128x784xf32>
    %11 = tpu.matmul %9, %10, %cst_8 {dimension_numbers = #tpu.dot_dimension_numbers<[1], [0], [0], [1], [0, 0, 1, 1], [], []>} : vector<128x384xbf16>, vector<384x784xbf16>, vector<128x784xf32> -> vector<128x784xf32>
    %c0_9 = arith.constant 0 : index
    %c0_10 = arith.constant 0 : index
    %12 = vector.load %arg5[%c0_9, %c0_10] : memref<1x784xf32, #tpu.memory_space<vmem>>, vector<1x784xf32>
    %13 = vector.broadcast %12 : vector<1x784xf32> to vector<128x784xf32>
    %14 = arith.addf %11, %13 : vector<128x784xf32>
    %15 = arith.truncf %14 : vector<128x784xf32> to vector<128x784xbf16>
    %c0_11 = arith.constant 0 : index
    %c0_12 = arith.constant 0 : index
    %16 = vector.load %arg6[%c0_11, %c0_12] : memref<128x784xbf16, #tpu.memory_space<vmem>>, vector<128x784xbf16>
    tpu.vector_store %arg6[%c0_11, %c0_12], %15 {strides = array<i32>} : memref<128x784xbf16, #tpu.memory_space<vmem>>, vector<128x784xbf16>,
    return
  }
  func.func @transform_0(%arg0: i32) -> (i32, i32) {
    %c0_i32 = arith.constant 0 : i32
    %c0_i32_0 = arith.constant 0 : i32
    return %arg0, %c0_i32 : i32, i32
  }
  func.func @transform_1(%arg0: i32) -> (i32, i32) {
    %c0_i32 = arith.constant 0 : i32
    %c0_i32_0 = arith.constant 0 : i32
    %c0_i32_1 = arith.constant 0 : i32
    return %c0_i32, %c0_i32_0 : i32, i32
  }
  func.func @transform_2(%arg0: i32) -> (i32, i32) {
    %c0_i32 = arith.constant 0 : i32
    %c0_i32_0 = arith.constant 0 : i32
    %c0_i32_1 = arith.constant 0 : i32
    return %c0_i32, %c0_i32_0 : i32, i32
  }
  func.func @transform_3(%arg0: i32) -> (i32, i32) {
    %c0_i32 = arith.constant 0 : i32
    %c0_i32_0 = arith.constant 0 : i32
    %c0_i32_1 = arith.constant 0 : i32
    return %c0_i32, %c0_i32_0 : i32, i32
  }
  func.func @transform_4(%arg0: i32) -> (i32, i32) {
    %c0_i32 = arith.constant 0 : i32
    %c0_i32_0 = arith.constant 0 : i32
    %c0_i32_1 = arith.constant 0 : i32
    return %c0_i32, %c0_i32_0 : i32, i32
  }
  func.func @transform_5(%arg0: i32) -> (i32, i32) {
    %c0_i32 = arith.constant 0 : i32
    %c0_i32_0 = arith.constant 0 : i32
    return %arg0, %c0_i32 : i32, i32
  }
}

</mosaic_0001>

<llo_original>
// kernel: decoder_forward.1
$region0: #{decoder_forward.1}
  #allocation0 [shape = 'u32[]', space=smem, size = 0x4, offset = 0x4, fixed_abs, tag = 'smem constant byte address 0x4 - core index']
  #allocation1 [shape = 'u32[144,128]{1,0:T(1,128)}', space=vmem, size = 0x12000, scoped, tag = 'internal scratch']
  %s0 = inlined_call_operand.vmem [shape: f32[200,36], index: 0, kind: input, shape index: {}]
  %s1 = inlined_call_operand.vmem [shape: bf16[36,384], index: 1, kind: input, shape index: {}]
  %s2 = inlined_call_operand.vmem [shape: f32[1,384], index: 2, kind: input, shape index: {}]
  %s3 = inlined_call_operand.vmem [shape: bf16[384,784], index: 3, kind: input, shape index: {}]
  %s4 = inlined_call_operand.vmem [shape: f32[1,784], index: 4, kind: input, shape index: {}]
  %s5 = inlined_call_operand.hbm [shape: bf16[200,784], index: 5, kind: output, shape index: {}]
  %s6 = sld [smem:[#allocation0]]
  $region53: #{decoder_forward.1} parent=0
    _
  %s8 = ssub.s32 1, %s6
  %s9 = scalar_select 0, %s8, %s6
  $region1: #{decoder_forward.1} parent=0
    #allocation2 [shape = 'u8[458752]{0}', space=vmem, size = 0x70000, scoped, tag = 'output window, operand 0']
    #allocation3 [shape = 's32[2]{0}', space=sflag, size = 0x8, scoped, tag = 'scoped memory for decoder_forward.1']
    %10 = vsyncpa [#allocation3], 0
    %s11 = scalar_lea.sflag [#allocation3], 1
    %12 = vsyncpa %s11, 0
    loop: start=0, step=1, limit=4
    $region2: #{decoder_forward.1} parent=1 // loop_pre_header
      _
    $region3: #{decoder_forward.1} parent=1 // loop_header
      %s14 = sphi 0, %s18
      %p15 = scmp.ge.s32.totalorder %s14, 4
      %s24 = sphi 0, %s26
      %s27 = sphi 0, %s24
      %s28 = sphi 0, %s27
      %s44 = sphi 0, %s28
      %s48 = sphi 0, %s48
      %s50 = sphi 0, %s48
      %s51 = sphi 0, %s50
      %s65 = sphi 0, %s51
      %s69 = sphi 0, %s69
      %s71 = sphi 0, %s69
      %s72 = sphi 0, %s71
      %s86 = sphi 0, %s72
      %s90 = sphi 0, %s90
      %s92 = sphi 0, %s90
      %s93 = sphi 0, %s92
      %s107 = sphi 0, %s93
      %s111 = sphi 0, %s111
      %s113 = sphi 0, %s111
      %s114 = sphi 0, %s113
      %s128 = sphi 0, %s114
      %s134 = sphi 0, %s136
      %s137 = sphi 0, %s134
      %s138 = sphi 0, %s137
      %s154 = sphi 0, %s138
    $region4: #{decoder_forward.1} parent=1 // loop_header_branch
      %17 = sbr.rel (%p15) target = $region8
    $region5: #{decoder_forward.1} parent=1 // loop_body
      %s19 = ssub.s32 %s14, 1
      %s20 = ssub.s32 %s14, 2
      %s21 = sadd.s32 %s14, 1
      %s22 = ssub.s32 %s14, %s21
      %p23 = scmp.eq.s32.totalorder %s22, 0
      %s25 = sadd.s32 %s24, 1
      %s26 = scalar_select %p23, %s24, %s25
      %p29 = pneg %p23
      %p30 = scmp.eq.s32.totalorder %s14, 1
      %p31 = por %p29, %p30
      %p32 = scmp.ne.s32.totalorder %s24, %s27
      %p33 = scmp.eq.s32.totalorder %s14, 0
      %p34 = por %p32, %p33
      %p35 = scmp.ne.s32.totalorder %s24, %s27
      %p36 = scmp.eq.s32.totalorder %s19, 1
      %p37 = por %p35, %p36
      %p38 = scmp.ne.s32.totalorder %s27, %s28
      %p39 = scmp.eq.s32.totalorder %s19, 0
      %p40 = por %p38, %p39
      %p41 = scmp.ne.s32.totalorder %s27, %s28
      %p42 = scmp.eq.s32.totalorder %s20, 1
      %p43 = por %p41, %p42
      %p45 = scmp.ne.s32.totalorder %s28, %s44
      %p46 = scmp.eq.s32.totalorder %s20, 0
      %p47 = por %p45, %p46
      %s49 = sadd.s32 %s48, 1
      %p52 = scmp.eq.s32.totalorder %s14, 1
      %p53 = scmp.ne.s32.totalorder %s48, %s50
      %p54 = scmp.eq.s32.totalorder %s14, 0
      %p55 = por %p53, %p54
      %p56 = scmp.ne.s32.totalorder %s48, %s50
      %p57 = scmp.eq.s32.totalorder %s19, 1
      %p58 = por %p56, %p57
      %p59 = scmp.ne.s32.totalorder %s50, %s51
      %p60 = scmp.eq.s32.totalorder %s19, 0
      %p61 = por %p59, %p60
      %p62 = scmp.ne.s32.totalorder %s50, %s51
      %p63 = scmp.eq.s32.totalorder %s20, 1
      %p64 = por %p62, %p63
      %p66 = scmp.ne.s32.totalorder %s51, %s65
      %p67 = scmp.eq.s32.totalorder %s20, 0
      %p68 = por %p66, %p67
      %s70 = sadd.s32 %s69, 1
      %p73 = scmp.eq.s32.totalorder %s14, 1
      %p74 = scmp.ne.s32.totalorder %s69, %s71
      %p75 = scmp.eq.s32.totalorder %s14, 0
      %p76 = por %p74, %p75
      %p77 = scmp.ne.s32.totalorder %s69, %s71
      %p78 = scmp.eq.s32.totalorder %s19, 1
      %p79 = por %p77, %p78
      %p80 = scmp.ne.s32.totalorder %s71, %s72
      %p81 = scmp.eq.s32.totalorder %s19, 0
      %p82 = por %p80, %p81
      %p83 = scmp.ne.s32.totalorder %s71, %s72
      %p84 = scmp.eq.s32.totalorder %s20, 1
      %p85 = por %p83, %p84
      %p87 = scmp.ne.s32.totalorder %s72, %s86
      %p88 = scmp.eq.s32.totalorder %s20, 0
      %p89 = por %p87, %p88
      %s91 = sadd.s32 %s90, 1
      %p94 = scmp.eq.s32.totalorder %s14, 1
      %p95 = scmp.ne.s32.totalorder %s90, %s92
      %p96 = scmp.eq.s32.totalorder %s14, 0
      %p97 = por %p95, %p96
      %p98 = scmp.ne.s32.totalorder %s90, %s92
      %p99 = scmp.eq.s32.totalorder %s19, 1
      %p100 = por %p98, %p99
      %p101 = scmp.ne.s32.totalorder %s92, %s93
      %p102 = scmp.eq.s32.totalorder %s19, 0
      %p103 = por %p101, %p102
      %p104 = scmp.ne.s32.totalorder %s92, %s93
      %p105 = scmp.eq.s32.totalorder %s20, 1
      %p106 = por %p104, %p105
      %p108 = scmp.ne.s32.totalorder %s93, %s107
      %p109 = scmp.eq.s32.totalorder %s20, 0
      %p110 = por %p108, %p109
      %s112 = sadd.s32 %s111, 1
      %p115 = scmp.eq.s32.totalorder %s14, 1
      %p116 = scmp.ne.s32.totalorder %s111, %s113
      %p117 = scmp.eq.s32.totalorder %s14, 0
      %p118 = por %p116, %p117
      %p119 = scmp.ne.s32.totalorder %s111, %s113
      %p120 = scmp.eq.s32.totalorder %s19, 1
      %p121 = por %p119, %p120
      %p122 = scmp.ne.s32.totalorder %s113, %s114
      %p123 = scmp.eq.s32.totalorder %s19, 0
      %p124 = por %p122, %p123
      %p125 = scmp.ne.s32.totalorder %s113, %s114
      %p126 = scmp.eq.s32.totalorder %s20, 1
      %p127 = por %p125, %p126
      %p129 = scmp.ne.s32.totalorder %s114, %s128
      %p130 = scmp.eq.s32.totalorder %s20, 0
      %p131 = por %p129, %p130
      %s132 = ssub.s32 %s14, %s21
      %p133 = scmp.eq.s32.totalorder %s132, 0
      %s135 = sadd.s32 %s134, 1
      %s136 = scalar_select %p133, %s134, %s135
      %p139 = pneg %p133
      %p140 = scmp.eq.s32.totalorder %s14, 1
      %p141 = por %p139, %p140
      %p142 = scmp.ne.s32.totalorder %s134, %s137
      %p143 = scmp.eq.s32.totalorder %s14, 0
      %p144 = por %p142, %p143
      %p145 = scmp.ne.s32.totalorder %s134, %s137
      %p146 = scmp.eq.s32.totalorder %s19, 1
      %p147 = por %p145, %p146
      %p148 = scmp.ne.s32.totalorder %s137, %s138
      %p149 = scmp.eq.s32.totalorder %s19, 0
      %p150 = por %p148, %p149
      %p151 = scmp.ne.s32.totalorder %s137, %s138
      %p152 = scmp.eq.s32.totalorder %s20, 1
      %p153 = por %p151, %p152
      %p155 = scmp.ne.s32.totalorder %s138, %s154
      %p156 = scmp.eq.s32.totalorder %s20, 0
      %p157 = por %p155, %p156
      %p158 = scmp.le.s32.totalorder 1, %s14
      %p159 = scmp.lt.s32.totalorder %s14, 3
      %p160 = pnand %p158, %p159
      %p161 = pneg %p160
      // Predicated region
      $region9: #{decoder_forward.1} parent=5 // pred_check
        _
      $region10: #{decoder_forward.1} parent=5 // pred_check_branch
        %163 = sbr.rel (%p160) target = $region12
      $region11: #{decoder_forward.1} parent=5 // pred_region
        %s164 = ssub.s32 %s14, 1
        // Predicated region
        $region13: #{decoder_forward.1} parent=11 // pred_check
          %p165 = pneg %p61
        $region14: #{decoder_forward.1} parent=11 // pred_check_branch
          %167 = sbr.rel (%p165) target = $region16
        $region15: #{decoder_forward.1} parent=11 // pred_region
          _
        $region16: #{decoder_forward.1} parent=11 // pred_fallthru
          _
        // Predicated region
        $region17: #{decoder_forward.1} parent=11 // pred_check
          %p168 = pneg %p82
        $region18: #{decoder_forward.1} parent=11 // pred_check_branch
          %170 = sbr.rel (%p168) target = $region20
        $region19: #{decoder_forward.1} parent=11 // pred_region
          _
        $region20: #{decoder_forward.1} parent=11 // pred_fallthru
          _
        // Predicated region
        $region21: #{decoder_forward.1} parent=11 // pred_check
          %p171 = pneg %p103
        $region22: #{decoder_forward.1} parent=11 // pred_check_branch
          %173 = sbr.rel (%p171) target = $region24
        $region23: #{decoder_forward.1} parent=11 // pred_region
          _
        $region24: #{decoder_forward.1} parent=11 // pred_fallthru
          _
        // Predicated region
        $region25: #{decoder_forward.1} parent=11 // pred_check
          %p174 = pneg %p124
        $region26: #{decoder_forward.1} parent=11 // pred_check_branch
          %176 = sbr.rel (%p174) target = $region28
        $region27: #{decoder_forward.1} parent=11 // pred_region
          _
        $region28: #{decoder_forward.1} parent=11 // pred_fallthru
          _
      $region12: #{decoder_forward.1} parent=5 // pred_fallthru
        _
      %p177 = scmp.lt.s32.totalorder %s14, 2
      // Predicated region
      $region29: #{decoder_forward.1} parent=5 // pred_check
        %p178 = pneg %p177
      $region30: #{decoder_forward.1} parent=5 // pred_check_branch
        %180 = sbr.rel (%p178) target = $region32
      $region31: #{decoder_forward.1} parent=5 // pred_region
        // Predicated region
        $region33: #{decoder_forward.1} parent=31 // pred_check
          %p181 = pneg %p34
        $region34: #{decoder_forward.1} parent=31 // pred_check_branch
          %183 = sbr.rel (%p181) target = $region36
        $region35: #{decoder_forward.1} parent=31 // pred_region
          %s184 = smul.u32 16, %s14
          %s185 = ssub.s32 25, %s184
          %p186 = scmp.lt.s32.totalorder %s185, 16
          %s187 = scalar_select %p186, %s185, 16
          %s188 = smul.u32 128, %s187
          %p189 = scmp.lt.s32.totalorder %s184, 24
          %s190 = scalar_select %p189, %s184, 24
          %s191 = smul.addr %s190, 8
          %s192 = scalar_lea.vmem %s0, %s191
          %s193 = smul.u32 16, %s14
          %s194 = ssub.s32 25, %s193
          %p195 = scmp.lt.s32.totalorder %s194, 16
          %s196 = scalar_select %p195, %s194, 16
          %s197 = smul.u32 128, %s196
        $region36: #{decoder_forward.1} parent=31 // pred_fallthru
          _
      $region32: #{decoder_forward.1} parent=5 // pred_fallthru
        _
      %p198 = scmp.le.s32.totalorder 1, %s14
      %p199 = scmp.lt.s32.totalorder %s14, 3
      %p200 = pnand %p198, %p199
      %p201 = pneg %p200
      // Predicated region
      $region37: #{decoder_forward.1} parent=5 // pred_check
        _
      $region38: #{decoder_forward.1} parent=5 // pred_check_branch
        %203 = sbr.rel (%p200) target = $region40
      $region39: #{decoder_forward.1} parent=5 // pred_region
        %s204 = ssub.s32 %s14, 1
        %s205 = smul.u32 16, %s19
        %s206 = ssub.s32 25, %s205
        %p207 = scmp.lt.s32.totalorder %s206, 16
        %s208 = scalar_select %p207, %s206, 16
        %s209 = smul.u32 128, %s208
        %p210 = scmp.lt.s32.totalorder %s205, 24
        %s211 = scalar_select %p210, %s205, 24
        %s212 = smul.addr %s211, 8
        %s213 = scalar_lea.vmem %s0, %s212
        %p214 = pneg %p40
        %p215 = pneg %p37
        %p216 = pneg %p61
        %p217 = pneg %p58
        %p218 = pneg %p82
        %p219 = pneg %p79
        %p220 = pneg %p103
        %p221 = pneg %p100
        %p222 = pneg %p124
        %p223 = pneg %p121
        %p224 = pneg %p150
        %p225 = pneg %p147
        %s226 = sand.u32 %s137, 1
        %s227 = scalar_lea.sflag [#allocation3], %s226
        %s228 = sand.u32 %s137, 1
        %s229 = smul.addr %s228, 448
        %s230 = scalar_lea.vmem [#allocation2], %s229
        %s231 = smul.u32 16, %s19
        %s232 = ssub.s32 25, %s231
        %p233 = scmp.lt.s32.totalorder %s232, 16
        %s234 = scalar_select %p233, %s232, 16
        %s235 = smul.u32 128, %s234
        %p236 = scmp.lt.s32.totalorder %s231, 24
        %s237 = scalar_select %p236, %s231, 24
        %s238 = smul.addr %s237, 8
        %s239 = scalar_lea.vmem %s0, %s238
        %s240 = smul.u32 16, %s19
        %s241 = ssub.s32 25, %s240
        %p242 = scmp.lt.s32.totalorder %s241, 16
        %s243 = scalar_select %p242, %s241, 16
        %s244 = smul.u32 128, %s243
        %s245 = smul.u32 16, %s19
        %s246 = ssub.s32 25, %s245
        %p247 = scmp.lt.s32.totalorder %s246, 16
        %s248 = scalar_select %p247, %s246, 16
        %s249 = smul.u32 64, %s248
        %s250 = smul.u32 %s249, 7
        %v252 = vld [vmem:[%s239] sm:$0xff]
        %v253 = vld [vmem:[%s239 + $0x8] sm:$0xff]
        %v254 = vld [vmem:[%s239 + $0x10] sm:$0xff]
        %v255 = vld [vmem:[%s239 + $0x18] sm:$0xff]
        %v256 = vld [vmem:[%s239 + $0x20] sm:$0xff]
        %v257 = vld [vmem:[%s239 + $0x28] sm:$0xff]
        %v258 = vld [vmem:[%s239 + $0x30] sm:$0xff]
        %v259 = vld [vmem:[%s239 + $0x38] sm:$0xff]
        %v260 = vld [vmem:[%s239 + $0x40] sm:$0xff]
        %v261 = vld [vmem:[%s239 + $0x48] sm:$0xff]
        %v262 = vld [vmem:[%s239 + $0x50] sm:$0xff]
        %v263 = vld [vmem:[%s239 + $0x58] sm:$0xff]
        %v264 = vld [vmem:[%s239 + $0x60] sm:$0xff]
        %v265 = vld [vmem:[%s239 + $0x68] sm:$0xff]
        %v266 = vld [vmem:[%s239 + $0x70] sm:$0xff]
        %v267 = vld [vmem:[%s239 + $0x78] sm:$0xff]
        %v268 = vpack.c.bf16 %v253, %v252
        %v269 = vpack.c.bf16 %v255, %v254
        %v270 = vpack.c.bf16 %v257, %v256
        %v271 = vpack.c.bf16 %v259, %v258
        %v272 = vpack.c.bf16 %v261, %v260
        %v273 = vpack.c.bf16 %v263, %v262
        %v274 = vpack.c.bf16 %v265, %v264
        %v275 = vpack.c.bf16 %v267, %v266
        %v276 = vld [vmem:[%s1] sm:$0xff]
        %v277 = vld [vmem:[%s1 + $0x8] sm:$0xf]
        %v278 = vld [vmem:[%s1 + $0xc] sm:$0xff]
        %v279 = vld [vmem:[%s1 + $0x14] sm:$0xf]
        %v280 = vld [vmem:[%s1 + $0x18] sm:$0xff]
        %v281 = vld [vmem:[%s1 + $0x20] sm:$0xf]
        %v282 = vld [vmem:[%s1 + $0x24] sm:$0xff]
        %v283 = vld [vmem:[%s1 + $0x2c] sm:$0xf]
        %v284 = vld [vmem:[%s1 + $0x30] sm:$0x33]
        %v285 = vld [vmem:[%s1 + $0x38] sm:$0x3]
        %v286 = vld [vmem:[%s2] sm:$0x7]
        %v288 = vlaneseq
        %v289 = vshrl.u32 %v288, 7
        %v290 = vsub.s32 0, %v289
        %v291 = vrot.slane %v286, %v290
        %v292 = vlaneseq
        %v293 = vshrl.u32 %v292, 7
        %v294 = vsub.s32 1, %v293
        %v295 = vrot.slane %v286, %v294
        %v296 = vlaneseq
        %v297 = vshrl.u32 %v296, 7
        %v298 = vsub.s32 2, %v297
        %v299 = vrot.slane %v286, %v298
        %v313 = vunpack.c.l.b16 %v276
        %v314 = vunpack.c.h.b16 %v276
        %v315 = vunpack.c.l.b16 %v277
        %v316 = vunpack.c.l.b16 %v278
        %v317 = vunpack.c.h.b16 %v278
        %v318 = vunpack.c.l.b16 %v279
        %v319 = vunpack.c.l.b16 %v280
        %v320 = vunpack.c.h.b16 %v280
        %v321 = vunpack.c.l.b16 %v281
        %v322 = vunpack.c.l.b16 %v282
        %v323 = vunpack.c.h.b16 %v282
        %v324 = vunpack.c.l.b16 %v283
        %v325 = vunpack.c.l.b16 %v284
        %v326 = vunpack.c.h.b16 %v284
        %v327 = vunpack.c.l.b16 %v285
        %v328 = vpack.c.b16 %v316, %v313
        %v329 = vpack.c.b16 %v317, %v314
        %v330 = vpack.c.b16 %v318, %v315
        %v331 = vpack.c.b16 %v322, %v319
        %v332 = vpack.c.b16 %v323, %v320
        %v333 = vpack.c.b16 %v324, %v321
        %v334 = vpack.c.b16 %v325, %v325
        %v335 = vpack.c.b16 %v326, %v326
        %v336 = vpack.c.b16 %v327, %v327
        %vm343 = vcmask 293888
        %v345 = vsel %vm343, %v268, 0
        %v348 = vsel %vm343, %v269, 0
        %v351 = vsel %vm343, %v270, 0
        %v354 = vsel %vm343, %v271, 0
        %v357 = vsel %vm343, %v272, 0
        %v360 = vsel %vm343, %v273, 0
        %v363 = vsel %vm343, %v274, 0
        %v366 = vsel %vm343, %v275, 0
        %vm368 = vcmask 1041408
        %v370 = vsel %vm368, %v334, 0
        %v373 = vsel %vm368, %v335, 0
        %v376 = vsel %vm368, %v336, 0
        %378 = vmatprep.subr.bf16.mxu0 %v329
        %379 = vmatpush1.bf16.msra.mxu0 %v328
        %380 = vmatprep.subr.bf16.mxu0 %v332
        %381 = vmatpush1.bf16.msra.mxu0 %v331
        %382 = vmatprep.subr.bf16.mxu0 %v373
        %383 = vmatpush1.bf16.msra.mxu0 %v370
        %384 = vmatprep.subr.bf16.mxu0 0
        %385 = vmatpush1.bf16.msra.mxu0 0
        %386 = vmatprep.subr.bf16.mxu0 0
        %387 = vmatpush1.bf16.msra.mxu0 0
        %388 = vmatprep.subr.bf16.mxu0 0
        %389 = vmatpush1.bf16.msra.mxu0 0
        %390 = vmatprep.subr.bf16.mxu0 0
        %391 = vmatpush1.bf16.msra.mxu0 0
        %392 = vmatprep.subr.bf16.mxu0 0
        %393 = vmatpush1.bf16.msra.mxu0 0
        %394 = vmatprep.subr.bf16.mxu0 0
        %395 = vmatpush1.bf16.msra.mxu0 0
        %396 = vmatprep.subr.bf16.mxu0 0
        %397 = vmatpush1.bf16.msra.mxu0 0
        %398 = vmatprep.subr.bf16.mxu0 0
        %399 = vmatpush1.bf16.msra.mxu0 0
        %400 = vmatprep.subr.bf16.mxu0 0
        %401 = vmatpush1.bf16.msra.mxu0 0
        %402 = vmatprep.subr.bf16.mxu0 0
        %403 = vmatpush1.bf16.msra.mxu0 0
        %404 = vmatprep.subr.bf16.mxu0 0
        %405 = vmatpush1.bf16.msra.mxu0 0
        %406 = vmatprep.subr.bf16.mxu0 0
        %407 = vmatpush1.bf16.msra.mxu0 0
        %408 = vmatprep.subr.bf16.mxu0 0
        %409 = vmatpush1.bf16.msra.mxu0 0
        %410 = vmatprep.mubr.bf16.mxu0 0
        %411 = vmatmul.mubr.bf16.gmra.mrb[0].mxu0 %v345
        %v412 = vpop.f32.mrb[0].mxu0
        %v413 = vadd.f32 %v291, %v412
        %v414 = vpop.f32.mrb[0].mxu0
        %v415 = vadd.f32 %v295, %v414
        %v416 = vpop.f32.mrb[0].mxu0
        %v417 = vadd.f32 %v291, %v416
        %v418 = vpop.f32.mrb[0].mxu0
        %v419 = vadd.f32 %v295, %v418
        %420 = vmatprep.mubr.bf16.mxu0 0
        %421 = vmatmul.mubr.bf16.gmra.mrb[0].mxu0 %v348
        %v422 = vpop.f32.mrb[0].mxu0
        %v423 = vadd.f32 %v291, %v422
        %v424 = vpop.f32.mrb[0].mxu0
        %v425 = vadd.f32 %v295, %v424
        %v426 = vpop.f32.mrb[0].mxu0
        %v427 = vadd.f32 %v291, %v426
        %v428 = vpop.f32.mrb[0].mxu0
        %v429 = vadd.f32 %v295, %v428
        %430 = vmatprep.mubr.bf16.mxu0 0
        %431 = vmatmul.mubr.bf16.gmra.mrb[0].mxu0 %v351
        %v432 = vpop.f32.mrb[0].mxu0
        %v433 = vadd.f32 %v291, %v432
        %v434 = vpop.f32.mrb[0].mxu0
        %v435 = vadd.f32 %v295, %v434
        %v436 = vpop.f32.mrb[0].mxu0
        %v437 = vadd.f32 %v291, %v436
        %v438 = vpop.f32.mrb[0].mxu0
        %v439 = vadd.f32 %v295, %v438
        %440 = vmatprep.mubr.bf16.mxu0 0
        %441 = vmatmul.mubr.bf16.gmra.mrb[0].mxu0 %v354
        %v442 = vpop.f32.mrb[0].mxu0
        %v443 = vadd.f32 %v291, %v442
        %v444 = vpop.f32.mrb[0].mxu0
        %v445 = vadd.f32 %v295, %v444
        %v446 = vpop.f32.mrb[0].mxu0
        %v447 = vadd.f32 %v291, %v446
        %v448 = vpop.f32.mrb[0].mxu0
        %v449 = vadd.f32 %v295, %v448
        %450 = vmatprep.mubr.bf16.mxu0 0
        %451 = vmatmul.mubr.bf16.gmra.mrb[0].mxu0 %v357
        %v452 = vpop.f32.mrb[0].mxu0
        %v453 = vadd.f32 %v291, %v452
        %v454 = vpop.f32.mrb[0].mxu0
        %v455 = vadd.f32 %v295, %v454
        %v456 = vpop.f32.mrb[0].mxu0
        %v457 = vadd.f32 %v291, %v456
        %v458 = vpop.f32.mrb[0].mxu0
        %v459 = vadd.f32 %v295, %v458
        %460 = vmatprep.mubr.bf16.mxu0 0
        %461 = vmatmul.mubr.bf16.gmra.mrb[0].mxu0 %v360
        %v462 = vpop.f32.mrb[0].mxu0
        %v463 = vadd.f32 %v291, %v462
        %v464 = vpop.f32.mrb[0].mxu0
        %v465 = vadd.f32 %v295, %v464
        %v466 = vpop.f32.mrb[0].mxu0
        %v467 = vadd.f32 %v291, %v466
        %v468 = vpop.f32.mrb[0].mxu0
        %v469 = vadd.f32 %v295, %v468
        %470 = vmatprep.mubr.bf16.mxu0 0
        %471 = vmatmul.mubr.bf16.gmra.mrb[0].mxu0 %v363
        %v472 = vpop.f32.mrb[0].mxu0
        %v473 = vadd.f32 %v291, %v472
        %v474 = vpop.f32.mrb[0].mxu0
        %v475 = vadd.f32 %v295, %v474
        %v476 = vpop.f32.mrb[0].mxu0
        %v477 = vadd.f32 %v291, %v476
        %v478 = vpop.f32.mrb[0].mxu0
        %v479 = vadd.f32 %v295, %v478
        %480 = vmatprep.mubr.bf16.mxu0 0
        %481 = vmatmul.mubr.bf16.gmra.mrb[0].mxu0 %v366
        %v482 = vpop.f32.mrb[0].mxu0
        %v483 = vadd.f32 %v291, %v482
        %v484 = vpop.f32.mrb[0].mxu0
        %v485 = vadd.f32 %v295, %v484
        %v486 = vpop.f32.mrb[0].mxu0
        %v487 = vadd.f32 %v291, %v486
        %v488 = vpop.f32.mrb[0].mxu0
        %v489 = vadd.f32 %v295, %v488
        %490 = vdwg.mxu0
        %491 = vmatprep.subr.bf16.mxu0 0
        %492 = vmatpush1.bf16.msra.mxu0 %v330
        %493 = vmatprep.subr.bf16.mxu0 0
        %494 = vmatpush1.bf16.msra.mxu0 %v333
        %495 = vmatprep.subr.bf16.mxu0 0
        %496 = vmatpush1.bf16.msra.mxu0 %v376
        %497 = vmatprep.subr.bf16.mxu0 0
        %498 = vmatpush1.bf16.msra.mxu0 0
        %499 = vmatprep.subr.bf16.mxu0 0
        %500 = vmatpush1.bf16.msra.mxu0 0
        %501 = vmatprep.subr.bf16.mxu0 0
        %502 = vmatpush1.bf16.msra.mxu0 0
        %503 = vmatprep.subr.bf16.mxu0 0
        %504 = vmatpush1.bf16.msra.mxu0 0
        %505 = vmatprep.subr.bf16.mxu0 0
        %506 = vmatpush1.bf16.msra.mxu0 0
        %507 = vmatprep.subr.bf16.mxu0 0
        %508 = vmatpush1.bf16.msra.mxu0 0
        %509 = vmatprep.subr.bf16.mxu0 0
        %510 = vmatpush1.bf16.msra.mxu0 0
        %511 = vmatprep.subr.bf16.mxu0 0
        %512 = vmatpush1.bf16.msra.mxu0 0
        %513 = vmatprep.subr.bf16.mxu0 0
        %514 = vmatpush1.bf16.msra.mxu0 0
        %515 = vmatprep.subr.bf16.mxu0 0
        %516 = vmatpush1.bf16.msra.mxu0 0
        %517 = vmatprep.subr.bf16.mxu0 0
        %518 = vmatpush1.bf16.msra.mxu0 0
        %519 = vmatprep.subr.bf16.mxu0 0
        %520 = vmatpush1.bf16.msra.mxu0 0
        %521 = vmatprep.subr.bf16.mxu0 0
        %522 = vmatpush1.bf16.msra.mxu0 0
        %523 = vmatprep.mubr.bf16.mxu0 0
        %524 = vmatmul.mubr.bf16.gmra.mrb[0].mxu0 %v345
        %v525 = vpop.f32.mrb[0].mxu0
        %v526 = vadd.f32 %v299, %v525
        %v527 = vpop.f32.mrb[0].mxu0
        %v528 = vpop.f32.mrb[0].mxu0
        %v529 = vadd.f32 %v299, %v528
        %v530 = vpop.f32.mrb[0].mxu0
        %531 = vmatprep.mubr.bf16.mxu0 0
        %532 = vmatmul.mubr.bf16.gmra.mrb[0].mxu0 %v348
        %v533 = vpop.f32.mrb[0].mxu0
        %v534 = vadd.f32 %v299, %v533
        %v535 = vpop.f32.mrb[0].mxu0
        %v536 = vpop.f32.mrb[0].mxu0
        %v537 = vadd.f32 %v299, %v536
        %v538 = vpop.f32.mrb[0].mxu0
        %539 = vmatprep.mubr.bf16.mxu0 0
        %540 = vmatmul.mubr.bf16.gmra.mrb[0].mxu0 %v351
        %v541 = vpop.f32.mrb[0].mxu0
        %v542 = vadd.f32 %v299, %v541
        %v543 = vpop.f32.mrb[0].mxu0
        %v544 = vpop.f32.mrb[0].mxu0
        %v545 = vadd.f32 %v299, %v544
        %v546 = vpop.f32.mrb[0].mxu0
        %547 = vmatprep.mubr.bf16.mxu0 0
        %548 = vmatmul.mubr.bf16.gmra.mrb[0].mxu0 %v354
        %v549 = vpop.f32.mrb[0].mxu0
        %v550 = vadd.f32 %v299, %v549
        %v551 = vpop.f32.mrb[0].mxu0
        %v552 = vpop.f32.mrb[0].mxu0
        %v553 = vadd.f32 %v299, %v552
        %v554 = vpop.f32.mrb[0].mxu0
        %555 = vmatprep.mubr.bf16.mxu0 0
        %556 = vmatmul.mubr.bf16.gmra.mrb[0].mxu0 %v357
        %v557 = vpop.f32.mrb[0].mxu0
        %v558 = vadd.f32 %v299, %v557
        %v559 = vpop.f32.mrb[0].mxu0
        %v560 = vpop.f32.mrb[0].mxu0
        %v561 = vadd.f32 %v299, %v560
        %v562 = vpop.f32.mrb[0].mxu0
        %563 = vmatprep.mubr.bf16.mxu0 0
        %564 = vmatmul.mubr.bf16.gmra.mrb[0].mxu0 %v360
        %v565 = vpop.f32.mrb[0].mxu0
        %v566 = vadd.f32 %v299, %v565
        %v567 = vpop.f32.mrb[0].mxu0
        %v568 = vpop.f32.mrb[0].mxu0
        %v569 = vadd.f32 %v299, %v568
        %v570 = vpop.f32.mrb[0].mxu0
        %571 = vmatprep.mubr.bf16.mxu0 0
        %572 = vmatmul.mubr.bf16.gmra.mrb[0].mxu0 %v363
        %v573 = vpop.f32.mrb[0].mxu0
        %v574 = vadd.f32 %v299, %v573
        %v575 = vpop.f32.mrb[0].mxu0
        %v576 = vpop.f32.mrb[0].mxu0
        %v577 = vadd.f32 %v299, %v576
        %v578 = vpop.f32.mrb[0].mxu0
        %579 = vmatprep.mubr.bf16.mxu0 0
        %580 = vmatmul.mubr.bf16.gmra.mrb[0].mxu0 %v366
        %v581 = vpop.f32.mrb[0].mxu0
        %v582 = vadd.f32 %v299, %v581
        %v583 = vpop.f32.mrb[0].mxu0
        %v584 = vpop.f32.mrb[0].mxu0
        %v585 = vadd.f32 %v299, %v584
        %v586 = vpop.f32.mrb[0].mxu0
        %587 = vdwg.mxu0
        %v588 = vmax.f32 %v413, 0.0
        %v589 = vmax.f32 %v415, 0.0
        %v590 = vmax.f32 %v526, 0.0
        %v591 = vmax.f32 %v417, 0.0
        %v592 = vmax.f32 %v419, 0.0
        %v593 = vmax.f32 %v529, 0.0
        %v594 = vmax.f32 %v423, 0.0
        %v595 = vmax.f32 %v425, 0.0
        %v596 = vmax.f32 %v534, 0.0
        %v597 = vmax.f32 %v427, 0.0
        %v598 = vmax.f32 %v429, 0.0
        %v599 = vmax.f32 %v537, 0.0
        %v600 = vmax.f32 %v433, 0.0
        %v601 = vmax.f32 %v435, 0.0
        %v602 = vmax.f32 %v542, 0.0
        %v603 = vmax.f32 %v437, 0.0
        %v604 = vmax.f32 %v439, 0.0
        %v605 = vmax.f32 %v545, 0.0
        %v606 = vmax.f32 %v443, 0.0
        %v607 = vmax.f32 %v445, 0.0
        %v608 = vmax.f32 %v550, 0.0
        %v609 = vmax.f32 %v447, 0.0
        %v610 = vmax.f32 %v449, 0.0
        %v611 = vmax.f32 %v553, 0.0
        %v612 = vmax.f32 %v453, 0.0
        %v613 = vmax.f32 %v455, 0.0
        %v614 = vmax.f32 %v558, 0.0
        %v615 = vmax.f32 %v457, 0.0
        %v616 = vmax.f32 %v459, 0.0
        %v617 = vmax.f32 %v561, 0.0
        %v618 = vmax.f32 %v463, 0.0
        %v619 = vmax.f32 %v465, 0.0
        %v620 = vmax.f32 %v566, 0.0
        %v621 = vmax.f32 %v467, 0.0
        %v622 = vmax.f32 %v469, 0.0
        %v623 = vmax.f32 %v569, 0.0
        %v624 = vmax.f32 %v473, 0.0
        %v625 = vmax.f32 %v475, 0.0
        %v626 = vmax.f32 %v574, 0.0
        %v627 = vmax.f32 %v477, 0.0
        %v628 = vmax.f32 %v479, 0.0
        %v629 = vmax.f32 %v577, 0.0
        %v630 = vmax.f32 %v483, 0.0
        %v631 = vmax.f32 %v485, 0.0
        %v632 = vmax.f32 %v582, 0.0
        %v633 = vmax.f32 %v487, 0.0
        %v634 = vmax.f32 %v489, 0.0
        %v635 = vmax.f32 %v585, 0.0
        %v636 = vpack.c.bf16 %v591, %v588
        %v637 = vpack.c.bf16 %v592, %v589
        %v638 = vpack.c.bf16 %v593, %v590
        %v639 = vpack.c.bf16 %v597, %v594
        %v640 = vpack.c.bf16 %v598, %v595
        %v641 = vpack.c.bf16 %v599, %v596
        %v642 = vpack.c.bf16 %v603, %v600
        %v643 = vpack.c.bf16 %v604, %v601
        %v644 = vpack.c.bf16 %v605, %v602
        %v645 = vpack.c.bf16 %v609, %v606
        %v646 = vpack.c.bf16 %v610, %v607
        %v647 = vpack.c.bf16 %v611, %v608
        %v648 = vpack.c.bf16 %v615, %v612
        %v649 = vpack.c.bf16 %v616, %v613
        %v650 = vpack.c.bf16 %v617, %v614
        %v651 = vpack.c.bf16 %v621, %v618
        %v652 = vpack.c.bf16 %v622, %v619
        %v653 = vpack.c.bf16 %v623, %v620
        %v654 = vpack.c.bf16 %v627, %v624
        %v655 = vpack.c.bf16 %v628, %v625
        %v656 = vpack.c.bf16 %v629, %v626
        %v657 = vpack.c.bf16 %v633, %v630
        %v658 = vpack.c.bf16 %v634, %v631
        %v659 = vpack.c.bf16 %v635, %v632
        %v660 = vld [vmem:[%s3] sm:$0xff]
        %v661 = vld [vmem:[%s3 + $0x8] sm:$0xff]
        %v662 = vld [vmem:[%s3 + $0x10] sm:$0xff]
        %v663 = vld [vmem:[%s3 + $0x18] sm:$0xf]
        %v664 = vld [vmem:[%s3 + $0x1c] sm:$0xff]
        %v665 = vld [vmem:[%s3 + $0x24] sm:$0xff]
        %v666 = vld [vmem:[%s3 + $0x2c] sm:$0xff]
        %v667 = vld [vmem:[%s3 + $0x34] sm:$0xf]
        %v668 = vld [vmem:[%s3 + $0x38] sm:$0xff]
        %v669 = vld [vmem:[%s3 + $0x40] sm:$0xff]
        %v670 = vld [vmem:[%s3 + $0x48] sm:$0xff]
        %v671 = vld [vmem:[%s3 + $0x50] sm:$0xf]
        %v672 = vld [vmem:[%s3 + $0x54] sm:$0xff]
        %v673 = vld [vmem:[%s3 + $0x5c] sm:$0xff]
        %v674 = vld [vmem:[%s3 + $0x64] sm:$0xff]
        %v675 = vld [vmem:[%s3 + $0x6c] sm:$0xf]
        %v676 = vld [vmem:[%s3 + $0x70] sm:$0xff]
        %v677 = vld [vmem:[%s3 + $0x78] sm:$0xff]
        %v678 = vld [vmem:[%s3 + $0x80] sm:$0xff]
        %v679 = vld [vmem:[%s3 + $0x88] sm:$0xf]
        %v680 = vld [vmem:[%s3 + $0x8c] sm:$0xff]
        %v681 = vld [vmem:[%s3 + $0x94] sm:$0xff]
        %v682 = vld [vmem:[%s3 + $0x9c] sm:$0xff]
        %v683 = vld [vmem:[%s3 + $0xa4] sm:$0xf]
        %v684 = vld [vmem:[%s3 + $0xa8] sm:$0xff]
        %v685 = vld [vmem:[%s3 + $0xb0] sm:$0xff]
        %v686 = vld [vmem:[%s3 + $0xb8] sm:$0xff]
        %v687 = vld [vmem:[%s3 + $0xc0] sm:$0xf]
        %v688 = vld [vmem:[%s3 + $0xc4] sm:$0xff]
        %v689 = vld [vmem:[%s3 + $0xcc] sm:$0xff]
        %v690 = vld [vmem:[%s3 + $0xd4] sm:$0xff]
        %v691 = vld [vmem:[%s3 + $0xdc] sm:$0xf]
        %v692 = vld [vmem:[%s3 + $0xe0] sm:$0xff]
        %v693 = vld [vmem:[%s3 + $0xe8] sm:$0xff]
        %v694 = vld [vmem:[%s3 + $0xf0] sm:$0xff]
        %v695 = vld [vmem:[%s3 + $0xf8] sm:$0xf]
        %v696 = vld [vmem:[%s3 + $0xfc] sm:$0xff]
        %v697 = vld [vmem:[%s3 + $0x104] sm:$0xff]
        %v698 = vld [vmem:[%s3 + $0x10c] sm:$0xff]
        %v699 = vld [vmem:[%s3 + $0x114] sm:$0xf]
        %v700 = vld [vmem:[%s3 + $0x118] sm:$0xff]
        %v701 = vld [vmem:[%s3 + $0x120] sm:$0xff]
        %v702 = vld [vmem:[%s3 + $0x128] sm:$0xff]
        %v703 = vld [vmem:[%s3 + $0x130] sm:$0xf]
        %v704 = vld [vmem:[%s3 + $0x134] sm:$0xff]
        %v705 = vld [vmem:[%s3 + $0x13c] sm:$0xff]
        %v706 = vld [vmem:[%s3 + $0x144] sm:$0xff]
        %v707 = vld [vmem:[%s3 + $0x14c] sm:$0xf]
        %v708 = vld [vmem:[%s3 + $0x150] sm:$0xff]
        %v709 = vld [vmem:[%s3 + $0x158] sm:$0xff]
        %v710 = vld [vmem:[%s3 + $0x160] sm:$0xff]
        %v711 = vld [vmem:[%s3 + $0x168] sm:$0xf]
        %v712 = vld [vmem:[%s3 + $0x16c] sm:$0xff]
        %v713 = vld [vmem:[%s3 + $0x174] sm:$0xff]
        %v714 = vld [vmem:[%s3 + $0x17c] sm:$0xff]
        %v715 = vld [vmem:[%s3 + $0x184] sm:$0xf]
        %v716 = vld [vmem:[%s3 + $0x188] sm:$0xff]
        %v717 = vld [vmem:[%s3 + $0x190] sm:$0xff]
        %v718 = vld [vmem:[%s3 + $0x198] sm:$0xff]
        %v719 = vld [vmem:[%s3 + $0x1a0] sm:$0xf]
        %v720 = vld [vmem:[%s3 + $0x1a4] sm:$0xff]
        %v721 = vld [vmem:[%s3 + $0x1ac] sm:$0xff]
        %v722 = vld [vmem:[%s3 + $0x1b4] sm:$0xff]
        %v723 = vld [vmem:[%s3 + $0x1bc] sm:$0xf]
        %v724 = vld [vmem:[%s3 + $0x1c0] sm:$0xff]
        %v725 = vld [vmem:[%s3 + $0x1c8] sm:$0xff]
        %v726 = vld [vmem:[%s3 + $0x1d0] sm:$0xff]
        %v727 = vld [vmem:[%s3 + $0x1d8] sm:$0xf]
        %v728 = vld [vmem:[%s3 + $0x1dc] sm:$0xff]
        %v729 = vld [vmem:[%s3 + $0x1e4] sm:$0xff]
        %v730 = vld [vmem:[%s3 + $0x1ec] sm:$0xff]
        %v731 = vld [vmem:[%s3 + $0x1f4] sm:$0xf]
        %v732 = vld [vmem:[%s3 + $0x1f8] sm:$0xff]
        %v733 = vld [vmem:[%s3 + $0x200] sm:$0xff]
        %v734 = vld [vmem:[%s3 + $0x208] sm:$0xff]
        %v735 = vld [vmem:[%s3 + $0x210] sm:$0xf]
        %v736 = vld [vmem:[%s3 + $0x214] sm:$0xff]
        %v737 = vld [vmem:[%s3 + $0x21c] sm:$0xff]
        %v738 = vld [vmem:[%s3 + $0x224] sm:$0xff]
        %v739 = vld [vmem:[%s3 + $0x22c] sm:$0xf]
        %v740 = vld [vmem:[%s3 + $0x230] sm:$0xff]
        %v741 = vld [vmem:[%s3 + $0x238] sm:$0xff]
        %v742 = vld [vmem:[%s3 + $0x240] sm:$0xff]
        %v743 = vld [vmem:[%s3 + $0x248] sm:$0xf]
        %v744 = vld [vmem:[%s3 + $0x24c] sm:$0xff]
        %v745 = vld [vmem:[%s3 + $0x254] sm:$0xff]
        %v746 = vld [vmem:[%s3 + $0x25c] sm:$0xff]
        %v747 = vld [vmem:[%s3 + $0x264] sm:$0xf]
        %v748 = vld [vmem:[%s3 + $0x268] sm:$0xff]
        %v749 = vld [vmem:[%s3 + $0x270] sm:$0xff]
        %v750 = vld [vmem:[%s3 + $0x278] sm:$0xff]
        %v751 = vld [vmem:[%s3 + $0x280] sm:$0xf]
        %v752 = vld [vmem:[%s3 + $0x284] sm:$0xff]
        %v753 = vld [vmem:[%s3 + $0x28c] sm:$0xff]
        %v754 = vld [vmem:[%s3 + $0x294] sm:$0xff]
        %v755 = vld [vmem:[%s3 + $0x29c] sm:$0xf]
        %v756 = vld [vmem:[%s3 + $0x2a0] sm:$0xff]
        %v757 = vld [vmem:[%s3 + $0x2a8] sm:$0xff]
        %v758 = vld [vmem:[%s3 + $0x2b0] sm:$0xff]
        %v759 = vld [vmem:[%s3 + $0x2b8] sm:$0xf]
        %v760 = vld [vmem:[%s3 + $0x2bc] sm:$0xff]
        %v761 = vld [vmem:[%s3 + $0x2c4] sm:$0xff]
        %v762 = vld [vmem:[%s3 + $0x2cc] sm:$0xff]
        %v763 = vld [vmem:[%s3 + $0x2d4] sm:$0xf]
        %v764 = vld [vmem:[%s3 + $0x2d8] sm:$0xff]
        %v765 = vld [vmem:[%s3 + $0x2e0] sm:$0xff]
        %v766 = vld [vmem:[%s3 + $0x2e8] sm:$0xff]
        %v767 = vld [vmem:[%s3 + $0x2f0] sm:$0xf]
        %v768 = vld [vmem:[%s3 + $0x2f4] sm:$0xff]
        %v769 = vld [vmem:[%s3 + $0x2fc] sm:$0xff]
        %v770 = vld [vmem:[%s3 + $0x304] sm:$0xff]
        %v771 = vld [vmem:[%s3 + $0x30c] sm:$0xf]
        %v772 = vld [vmem:[%s3 + $0x310] sm:$0xff]
        %v773 = vld [vmem:[%s3 + $0x318] sm:$0xff]
        %v774 = vld [vmem:[%s3 + $0x320] sm:$0xff]
        %v775 = vld [vmem:[%s3 + $0x328] sm:$0xf]
        %v776 = vld [vmem:[%s3 + $0x32c] sm:$0xff]
        %v777 = vld [vmem:[%s3 + $0x334] sm:$0xff]
        %v778 = vld [vmem:[%s3 + $0x33c] sm:$0xff]
        %v779 = vld [vmem:[%s3 + $0x344] sm:$0xf]
        %v780 = vld [vmem:[%s3 + $0x348] sm:$0xff]
        %v781 = vld [vmem:[%s3 + $0x350] sm:$0xff]
        %v782 = vld [vmem:[%s3 + $0x358] sm:$0xff]
        %v783 = vld [vmem:[%s3 + $0x360] sm:$0xf]
        %v784 = vld [vmem:[%s3 + $0x364] sm:$0xff]
        %v785 = vld [vmem:[%s3 + $0x36c] sm:$0xff]
        %v786 = vld [vmem:[%s3 + $0x374] sm:$0xff]
        %v787 = vld [vmem:[%s3 + $0x37c] sm:$0xf]
        %v788 = vld [vmem:[%s3 + $0x380] sm:$0xff]
        %v789 = vld [vmem:[%s3 + $0x388] sm:$0xff]
        %v790 = vld [vmem:[%s3 + $0x390] sm:$0xff]
        %v791 = vld [vmem:[%s3 + $0x398] sm:$0xf]
        %v792 = vld [vmem:[%s3 + $0x39c] sm:$0xff]
        %v793 = vld [vmem:[%s3 + $0x3a4] sm:$0xff]
        %v794 = vld [vmem:[%s3 + $0x3ac] sm:$0xff]
        %v795 = vld [vmem:[%s3 + $0x3b4] sm:$0xf]
        %v796 = vld [vmem:[%s3 + $0x3b8] sm:$0xff]
        %v797 = vld [vmem:[%s3 + $0x3c0] sm:$0xff]
        %v798 = vld [vmem:[%s3 + $0x3c8] sm:$0xff]
        %v799 = vld [vmem:[%s3 + $0x3d0] sm:$0xf]
        %v800 = vld [vmem:[%s3 + $0x3d4] sm:$0xff]
        %v801 = vld [vmem:[%s3 + $0x3dc] sm:$0xff]
        %v802 = vld [vmem:[%s3 + $0x3e4] sm:$0xff]
        %v803 = vld [vmem:[%s3 + $0x3ec] sm:$0xf]
        %v804 = vld [vmem:[%s3 + $0x3f0] sm:$0xff]
        %v805 = vld [vmem:[%s3 + $0x3f8] sm:$0xff]
        %v806 = vld [vmem:[%s3 + $0x400] sm:$0xff]
        %v807 = vld [vmem:[%s3 + $0x408] sm:$0xf]
        %v808 = vld [vmem:[%s3 + $0x40c] sm:$0xff]
        %v809 = vld [vmem:[%s3 + $0x414] sm:$0xff]
        %v810 = vld [vmem:[%s3 + $0x41c] sm:$0xff]
        %v811 = vld [vmem:[%s3 + $0x424] sm:$0xf]
        %v812 = vld [vmem:[%s3 + $0x428] sm:$0xff]
        %v813 = vld [vmem:[%s3 + $0x430] sm:$0xff]
        %v814 = vld [vmem:[%s3 + $0x438] sm:$0xff]
        %v815 = vld [vmem:[%s3 + $0x440] sm:$0xf]
        %v816 = vld [vmem:[%s3 + $0x444] sm:$0xff]
        %v817 = vld [vmem:[%s3 + $0x44c] sm:$0xff]
        %v818 = vld [vmem:[%s3 + $0x454] sm:$0xff]
        %v819 = vld [vmem:[%s3 + $0x45c] sm:$0xf]
        %v820 = vld [vmem:[%s3 + $0x460] sm:$0xff]
        %v821 = vld [vmem:[%s3 + $0x468] sm:$0xff]
        %v822 = vld [vmem:[%s3 + $0x470] sm:$0xff]
        %v823 = vld [vmem:[%s3 + $0x478] sm:$0xf]
        %v824 = vld [vmem:[%s3 + $0x47c] sm:$0xff]
        %v825 = vld [vmem:[%s3 + $0x484] sm:$0xff]
        %v826 = vld [vmem:[%s3 + $0x48c] sm:$0xff]
        %v827 = vld [vmem:[%s3 + $0x494] sm:$0xf]
        %v828 = vld [vmem:[%s3 + $0x498] sm:$0xff]
        %v829 = vld [vmem:[%s3 + $0x4a0] sm:$0xff]
        %v830 = vld [vmem:[%s3 + $0x4a8] sm:$0xff]
        %v831 = vld [vmem:[%s3 + $0x4b0] sm:$0xf]
        %v832 = vld [vmem:[%s3 + $0x4b4] sm:$0xff]
        %v833 = vld [vmem:[%s3 + $0x4bc] sm:$0xff]
        %v834 = vld [vmem:[%s3 + $0x4c4] sm:$0xff]
        %v835 = vld [vmem:[%s3 + $0x4cc] sm:$0xf]
        %v836 = vld [vmem:[%s3 + $0x4d0] sm:$0xff]
        %v837 = vld [vmem:[%s3 + $0x4d8] sm:$0xff]
        %v838 = vld [vmem:[%s3 + $0x4e0] sm:$0xff]
        %v839 = vld [vmem:[%s3 + $0x4e8] sm:$0xf]
        %v840 = vld [vmem:[%s3 + $0x4ec] sm:$0xff]
        %v841 = vld [vmem:[%s3 + $0x4f4] sm:$0xff]
        %v842 = vld [vmem:[%s3 + $0x4fc] sm:$0xff]
        %v843 = vld [vmem:[%s3 + $0x504] sm:$0xf]
        %v844 = vld [vmem:[%s3 + $0x508] sm:$0xff]
        %v845 = vld [vmem:[%s3 + $0x510] sm:$0xff]
        %v846 = vld [vmem:[%s3 + $0x518] sm:$0xff]
        %v847 = vld [vmem:[%s3 + $0x520] sm:$0xf]
        %v848 = vld [vmem:[%s3 + $0x524] sm:$0xff]
        %v849 = vld [vmem:[%s3 + $0x52c] sm:$0xff]
        %v850 = vld [vmem:[%s3 + $0x534] sm:$0xff]
        %v851 = vld [vmem:[%s3 + $0x53c] sm:$0xf]
        %v852 = vld [vmem:[%s4] sm:$0x7f]
        %v854 = vlaneseq
        %v855 = vshrl.u32 %v854, 7
        %v856 = vsub.s32 0, %v855
        %v857 = vrot.slane %v852, %v856
        %v858 = vlaneseq
        %v859 = vshrl.u32 %v858, 7
        %v860 = vsub.s32 1, %v859
        %v861 = vrot.slane %v852, %v860
        %v862 = vlaneseq
        %v863 = vshrl.u32 %v862, 7
        %v864 = vsub.s32 2, %v863
        %v865 = vrot.slane %v852, %v864
        %v866 = vlaneseq
        %v867 = vshrl.u32 %v866, 7
        %v868 = vsub.s32 3, %v867
        %v869 = vrot.slane %v852, %v868
        %v870 = vlaneseq
        %v871 = vshrl.u32 %v870, 7
        %v872 = vsub.s32 4, %v871
        %v873 = vrot.slane %v852, %v872
        %v874 = vlaneseq
        %v875 = vshrl.u32 %v874, 7
        %v876 = vsub.s32 5, %v875
        %v877 = vrot.slane %v852, %v876
        %v878 = vlaneseq
        %v879 = vshrl.u32 %v878, 7
        %v880 = vsub.s32 6, %v879
        %v881 = vrot.slane %v852, %v880
        %v1081 = vunpack.c.l.b16 %v660
        %v1082 = vunpack.c.h.b16 %v660
        %v1083 = vunpack.c.l.b16 %v661
        %v1084 = vunpack.c.h.b16 %v661
        %v1085 = vunpack.c.l.b16 %v662
        %v1086 = vunpack.c.h.b16 %v662
        %v1087 = vunpack.c.l.b16 %v663
        %v1088 = vunpack.c.l.b16 %v664
        %v1089 = vunpack.c.h.b16 %v664
        %v1090 = vunpack.c.l.b16 %v665
        %v1091 = vunpack.c.h.b16 %v665
        %v1092 = vunpack.c.l.b16 %v666
        %v1093 = vunpack.c.h.b16 %v666
        %v1094 = vunpack.c.l.b16 %v667
        %v1095 = vunpack.c.l.b16 %v668
        %v1096 = vunpack.c.h.b16 %v668
        %v1097 = vunpack.c.l.b16 %v669
        %v1098 = vunpack.c.h.b16 %v669
        %v1099 = vunpack.c.l.b16 %v670
        %v1100 = vunpack.c.h.b16 %v670
        %v1101 = vunpack.c.l.b16 %v671
        %v1102 = vunpack.c.l.b16 %v672
        %v1103 = vunpack.c.h.b16 %v672
        %v1104 = vunpack.c.l.b16 %v673
        %v1105 = vunpack.c.h.b16 %v673
        %v1106 = vunpack.c.l.b16 %v674
        %v1107 = vunpack.c.h.b16 %v674
        %v1108 = vunpack.c.l.b16 %v675
        %v1109 = vunpack.c.l.b16 %v676
        %v1110 = vunpack.c.h.b16 %v676
        %v1111 = vunpack.c.l.b16 %v677
        %v1112 = vunpack.c.h.b16 %v677
        %v1113 = vunpack.c.l.b16 %v678
        %v1114 = vunpack.c.h.b16 %v678
        %v1115 = vunpack.c.l.b16 %v679
        %v1116 = vunpack.c.l.b16 %v680
        %v1117 = vunpack.c.h.b16 %v680
        %v1118 = vunpack.c.l.b16 %v681
        %v1119 = vunpack.c.h.b16 %v681
        %v1120 = vunpack.c.l.b16 %v682
        %v1121 = vunpack.c.h.b16 %v682
        %v1122 = vunpack.c.l.b16 %v683
        %v1123 = vunpack.c.l.b16 %v684
        %v1124 = vunpack.c.h.b16 %v684
        %v1125 = vunpack.c.l.b16 %v685
        %v1126 = vunpack.c.h.b16 %v685
        %v1127 = vunpack.c.l.b16 %v686
        %v1128 = vunpack.c.h.b16 %v686
        %v1129 = vunpack.c.l.b16 %v687
        %v1130 = vunpack.c.l.b16 %v688
        %v1131 = vunpack.c.h.b16 %v688
        %v1132 = vunpack.c.l.b16 %v689
        %v1133 = vunpack.c.h.b16 %v689
        %v1134 = vunpack.c.l.b16 %v690
        %v1135 = vunpack.c.h.b16 %v690
        %v1136 = vunpack.c.l.b16 %v691
        %v1137 = vunpack.c.l.b16 %v692
        %v1138 = vunpack.c.h.b16 %v692
        %v1139 = vunpack.c.l.b16 %v693
        %v1140 = vunpack.c.h.b16 %v693
        %v1141 = vunpack.c.l.b16 %v694
        %v1142 = vunpack.c.h.b16 %v694
        %v1143 = vunpack.c.l.b16 %v695
        %v1144 = vunpack.c.l.b16 %v696
        %v1145 = vunpack.c.h.b16 %v696
        %v1146 = vunpack.c.l.b16 %v697
        %v1147 = vunpack.c.h.b16 %v697
        %v1148 = vunpack.c.l.b16 %v698
        %v1149 = vunpack.c.h.b16 %v698
        %v1150 = vunpack.c.l.b16 %v699
        %v1151 = vunpack.c.l.b16 %v700
        %v1152 = vunpack.c.h.b16 %v700
        %v1153 = vunpack.c.l.b16 %v701
        %v1154 = vunpack.c.h.b16 %v701
        %v1155 = vunpack.c.l.b16 %v702
        %v1156 = vunpack.c.h.b16 %v702
        %v1157 = vunpack.c.l.b16 %v703
        %v1158 = vunpack.c.l.b16 %v704
        %v1159 = vunpack.c.h.b16 %v704
        %v1160 = vunpack.c.l.b16 %v705
        %v1161 = vunpack.c.h.b16 %v705
        %v1162 = vunpack.c.l.b16 %v706
        %v1163 = vunpack.c.h.b16 %v706
        %v1164 = vunpack.c.l.b16 %v707
        %v1165 = vunpack.c.l.b16 %v708
        %v1166 = vunpack.c.h.b16 %v708
        %v1167 = vunpack.c.l.b16 %v709
        %v1168 = vunpack.c.h.b16 %v709
        %v1169 = vunpack.c.l.b16 %v710
        %v1170 = vunpack.c.h.b16 %v710
        %v1171 = vunpack.c.l.b16 %v711
        %v1172 = vunpack.c.l.b16 %v712
        %v1173 = vunpack.c.h.b16 %v712
        %v1174 = vunpack.c.l.b16 %v713
        %v1175 = vunpack.c.h.b16 %v713
        %v1176 = vunpack.c.l.b16 %v714
        %v1177 = vunpack.c.h.b16 %v714
        %v1178 = vunpack.c.l.b16 %v715
        %v1179 = vunpack.c.l.b16 %v716
        %v1180 = vunpack.c.h.b16 %v716
        %v1181 = vunpack.c.l.b16 %v717
        %v1182 = vunpack.c.h.b16 %v717
        %v1183 = vunpack.c.l.b16 %v718
        %v1184 = vunpack.c.h.b16 %v718
        %v1185 = vunpack.c.l.b16 %v719
        %v1186 = vunpack.c.l.b16 %v720
        %v1187 = vunpack.c.h.b16 %v720
        %v1188 = vunpack.c.l.b16 %v721
        %v1189 = vunpack.c.h.b16 %v721
        %v1190 = vunpack.c.l.b16 %v722
        %v1191 = vunpack.c.h.b16 %v722
        %v1192 = vunpack.c.l.b16 %v723
        %v1193 = vunpack.c.l.b16 %v724
        %v1194 = vunpack.c.h.b16 %v724
        %v1195 = vunpack.c.l.b16 %v725
        %v1196 = vunpack.c.h.b16 %v725
        %v1197 = vunpack.c.l.b16 %v726
        %v1198 = vunpack.c.h.b16 %v726
        %v1199 = vunpack.c.l.b16 %v727
        %v1200 = vunpack.c.l.b16 %v728
        %v1201 = vunpack.c.h.b16 %v728
        %v1202 = vunpack.c.l.b16 %v729
        %v1203 = vunpack.c.h.b16 %v729
        %v1204 = vunpack.c.l.b16 %v730
        %v1205 = vunpack.c.h.b16 %v730
        %v1206 = vunpack.c.l.b16 %v731
        %v1207 = vunpack.c.l.b16 %v732
        %v1208 = vunpack.c.h.b16 %v732
        %v1209 = vunpack.c.l.b16 %v733
        %v1210 = vunpack.c.h.b16 %v733
        %v1211 = vunpack.c.l.b16 %v734
        %v1212 = vunpack.c.h.b16 %v734
        %v1213 = vunpack.c.l.b16 %v735
        %v1214 = vunpack.c.l.b16 %v736
        %v1215 = vunpack.c.h.b16 %v736
        %v1216 = vunpack.c.l.b16 %v737
        %v1217 = vunpack.c.h.b16 %v737
        %v1218 = vunpack.c.l.b16 %v738
        %v1219 = vunpack.c.h.b16 %v738
        %v1220 = vunpack.c.l.b16 %v739
        %v1221 = vunpack.c.l.b16 %v740
        %v1222 = vunpack.c.h.b16 %v740
        %v1223 = vunpack.c.l.b16 %v741
        %v1224 = vunpack.c.h.b16 %v741
        %v1225 = vunpack.c.l.b16 %v742
        %v1226 = vunpack.c.h.b16 %v742
        %v1227 = vunpack.c.l.b16 %v743
        %v1228 = vunpack.c.l.b16 %v744
        %v1229 = vunpack.c.h.b16 %v744
        %v1230 = vunpack.c.l.b16 %v745
        %v1231 = vunpack.c.h.b16 %v745
        %v1232 = vunpack.c.l.b16 %v746
        %v1233 = vunpack.c.h.b16 %v746
        %v1234 = vunpack.c.l.b16 %v747
        %v1235 = vunpack.c.l.b16 %v748
        %v1236 = vunpack.c.h.b16 %v748
        %v1237 = vunpack.c.l.b16 %v749
        %v1238 = vunpack.c.h.b16 %v749
        %v1239 = vunpack.c.l.b16 %v750
        %v1240 = vunpack.c.h.b16 %v750
        %v1241 = vunpack.c.l.b16 %v751
        %v1242 = vunpack.c.l.b16 %v752
        %v1243 = vunpack.c.h.b16 %v752
        %v1244 = vunpack.c.l.b16 %v753
        %v1245 = vunpack.c.h.b16 %v753
        %v1246 = vunpack.c.l.b16 %v754
        %v1247 = vunpack.c.h.b16 %v754
        %v1248 = vunpack.c.l.b16 %v755
        %v1249 = vunpack.c.l.b16 %v756
        %v1250 = vunpack.c.h.b16 %v756
        %v1251 = vunpack.c.l.b16 %v757
        %v1252 = vunpack.c.h.b16 %v757
        %v1253 = vunpack.c.l.b16 %v758
        %v1254 = vunpack.c.h.b16 %v758
        %v1255 = vunpack.c.l.b16 %v759
        %v1256 = vunpack.c.l.b16 %v760
        %v1257 = vunpack.c.h.b16 %v760
        %v1258 = vunpack.c.l.b16 %v761
        %v1259 = vunpack.c.h.b16 %v761
        %v1260 = vunpack.c.l.b16 %v762
        %v1261 = vunpack.c.h.b16 %v762
        %v1262 = vunpack.c.l.b16 %v763
        %v1263 = vunpack.c.l.b16 %v764
        %v1264 = vunpack.c.h.b16 %v764
        %v1265 = vunpack.c.l.b16 %v765
        %v1266 = vunpack.c.h.b16 %v765
        %v1267 = vunpack.c.l.b16 %v766
        %v1268 = vunpack.c.h.b16 %v766
        %v1269 = vunpack.c.l.b16 %v767
        %v1270 = vunpack.c.l.b16 %v768
        %v1271 = vunpack.c.h.b16 %v768
        %v1272 = vunpack.c.l.b16 %v769
        %v1273 = vunpack.c.h.b16 %v769
        %v1274 = vunpack.c.l.b16 %v770
        %v1275 = vunpack.c.h.b16 %v770
        %v1276 = vunpack.c.l.b16 %v771
        %v1277 = vunpack.c.l.b16 %v772
        %v1278 = vunpack.c.h.b16 %v772
        %v1279 = vunpack.c.l.b16 %v773
        %v1280 = vunpack.c.h.b16 %v773
        %v1281 = vunpack.c.l.b16 %v774
        %v1282 = vunpack.c.h.b16 %v774
        %v1283 = vunpack.c.l.b16 %v775
        %v1284 = vunpack.c.l.b16 %v776
        %v1285 = vunpack.c.h.b16 %v776
        %v1286 = vunpack.c.l.b16 %v777
        %v1287 = vunpack.c.h.b16 %v777
        %v1288 = vunpack.c.l.b16 %v778
        %v1289 = vunpack.c.h.b16 %v778
        %v1290 = vunpack.c.l.b16 %v779
        %v1291 = vunpack.c.l.b16 %v780
        %v1292 = vunpack.c.h.b16 %v780
        %v1293 = vunpack.c.l.b16 %v781
        %v1294 = vunpack.c.h.b16 %v781
        %v1295 = vunpack.c.l.b16 %v782
        %v1296 = vunpack.c.h.b16 %v782
        %v1297 = vunpack.c.l.b16 %v783
        %v1298 = vunpack.c.l.b16 %v784
        %v1299 = vunpack.c.h.b16 %v784
        %v1300 = vunpack.c.l.b16 %v785
        %v1301 = vunpack.c.h.b16 %v785
        %v1302 = vunpack.c.l.b16 %v786
        %v1303 = vunpack.c.h.b16 %v786
        %v1304 = vunpack.c.l.b16 %v787
        %v1305 = vunpack.c.l.b16 %v788
        %v1306 = vunpack.c.h.b16 %v788
        %v1307 = vunpack.c.l.b16 %v789
        %v1308 = vunpack.c.h.b16 %v789
        %v1309 = vunpack.c.l.b16 %v790
        %v1310 = vunpack.c.h.b16 %v790
        %v1311 = vunpack.c.l.b16 %v791
        %v1312 = vunpack.c.l.b16 %v792
        %v1313 = vunpack.c.h.b16 %v792
        %v1314 = vunpack.c.l.b16 %v793
        %v1315 = vunpack.c.h.b16 %v793
        %v1316 = vunpack.c.l.b16 %v794
        %v1317 = vunpack.c.h.b16 %v794
        %v1318 = vunpack.c.l.b16 %v795
        %v1319 = vunpack.c.l.b16 %v796
        %v1320 = vunpack.c.h.b16 %v796
        %v1321 = vunpack.c.l.b16 %v797
        %v1322 = vunpack.c.h.b16 %v797
        %v1323 = vunpack.c.l.b16 %v798
        %v1324 = vunpack.c.h.b16 %v798
        %v1325 = vunpack.c.l.b16 %v799
        %v1326 = vunpack.c.l.b16 %v800
        %v1327 = vunpack.c.h.b16 %v800
        %v1328 = vunpack.c.l.b16 %v801
        %v1329 = vunpack.c.h.b16 %v801
        %v1330 = vunpack.c.l.b16 %v802
        %v1331 = vunpack.c.h.b16 %v802
        %v1332 = vunpack.c.l.b16 %v803
        %v1333 = vunpack.c.l.b16 %v804
        %v1334 = vunpack.c.h.b16 %v804
        %v1335 = vunpack.c.l.b16 %v805
        %v1336 = vunpack.c.h.b16 %v805
        %v1337 = vunpack.c.l.b16 %v806
        %v1338 = vunpack.c.h.b16 %v806
        %v1339 = vunpack.c.l.b16 %v807
        %v1340 = vunpack.c.l.b16 %v808
        %v1341 = vunpack.c.h.b16 %v808
        %v1342 = vunpack.c.l.b16 %v809
        %v1343 = vunpack.c.h.b16 %v809
        %v1344 = vunpack.c.l.b16 %v810
        %v1345 = vunpack.c.h.b16 %v810
        %v1346 = vunpack.c.l.b16 %v811
        %v1347 = vunpack.c.l.b16 %v812
        %v1348 = vunpack.c.h.b16 %v812
        %v1349 = vunpack.c.l.b16 %v813
        %v1350 = vunpack.c.h.b16 %v813
        %v1351 = vunpack.c.l.b16 %v814
        %v1352 = vunpack.c.h.b16 %v814
        %v1353 = vunpack.c.l.b16 %v815
        %v1354 = vunpack.c.l.b16 %v816
        %v1355 = vunpack.c.h.b16 %v816
        %v1356 = vunpack.c.l.b16 %v817
        %v1357 = vunpack.c.h.b16 %v817
        %v1358 = vunpack.c.l.b16 %v818
        %v1359 = vunpack.c.h.b16 %v818
        %v1360 = vunpack.c.l.b16 %v819
        %v1361 = vunpack.c.l.b16 %v820
        %v1362 = vunpack.c.h.b16 %v820
        %v1363 = vunpack.c.l.b16 %v821
        %v1364 = vunpack.c.h.b16 %v821
        %v1365 = vunpack.c.l.b16 %v822
        %v1366 = vunpack.c.h.b16 %v822
        %v1367 = vunpack.c.l.b16 %v823
        %v1368 = vunpack.c.l.b16 %v824
        %v1369 = vunpack.c.h.b16 %v824
        %v1370 = vunpack.c.l.b16 %v825
        %v1371 = vunpack.c.h.b16 %v825
        %v1372 = vunpack.c.l.b16 %v826
        %v1373 = vunpack.c.h.b16 %v826
        %v1374 = vunpack.c.l.b16 %v827
        %v1375 = vunpack.c.l.b16 %v828
        %v1376 = vunpack.c.h.b16 %v828
        %v1377 = vunpack.c.l.b16 %v829
        %v1378 = vunpack.c.h.b16 %v829
        %v1379 = vunpack.c.l.b16 %v830
        %v1380 = vunpack.c.h.b16 %v830
        %v1381 = vunpack.c.l.b16 %v831
        %v1382 = vunpack.c.l.b16 %v832
        %v1383 = vunpack.c.h.b16 %v832
        %v1384 = vunpack.c.l.b16 %v833
        %v1385 = vunpack.c.h.b16 %v833
        %v1386 = vunpack.c.l.b16 %v834
        %v1387 = vunpack.c.h.b16 %v834
        %v1388 = vunpack.c.l.b16 %v835
        %v1389 = vunpack.c.l.b16 %v836
        %v1390 = vunpack.c.h.b16 %v836
        %v1391 = vunpack.c.l.b16 %v837
        %v1392 = vunpack.c.h.b16 %v837
        %v1393 = vunpack.c.l.b16 %v838
        %v1394 = vunpack.c.h.b16 %v838
        %v1395 = vunpack.c.l.b16 %v839
        %v1396 = vunpack.c.l.b16 %v840
        %v1397 = vunpack.c.h.b16 %v840
        %v1398 = vunpack.c.l.b16 %v841
        %v1399 = vunpack.c.h.b16 %v841
        %v1400 = vunpack.c.l.b16 %v842
        %v1401 = vunpack.c.h.b16 %v842
        %v1402 = vunpack.c.l.b16 %v843
        %v1403 = vunpack.c.l.b16 %v844
        %v1404 = vunpack.c.h.b16 %v844
        %v1405 = vunpack.c.l.b16 %v845
        %v1406 = vunpack.c.h.b16 %v845
        %v1407 = vunpack.c.l.b16 %v846
        %v1408 = vunpack.c.h.b16 %v846
        %v1409 = vunpack.c.l.b16 %v847
        %v1410 = vunpack.c.l.b16 %v848
        %v1411 = vunpack.c.h.b16 %v848
        %v1412 = vunpack.c.l.b16 %v849
        %v1413 = vunpack.c.h.b16 %v849
        %v1414 = vunpack.c.l.b16 %v850
        %v1415 = vunpack.c.h.b16 %v850
        %v1416 = vunpack.c.l.b16 %v851
        %v1417 = vpack.c.b16 %v1088, %v1081
        %v1418 = vpack.c.b16 %v1089, %v1082
        %v1419 = vpack.c.b16 %v1090, %v1083
        %v1420 = vpack.c.b16 %v1091, %v1084
        %v1421 = vpack.c.b16 %v1092, %v1085
        %v1422 = vpack.c.b16 %v1093, %v1086
        %v1423 = vpack.c.b16 %v1094, %v1087
        %v1424 = vpack.c.b16 %v1102, %v1095
        %v1425 = vpack.c.b16 %v1103, %v1096
        %v1426 = vpack.c.b16 %v1104, %v1097
        %v1427 = vpack.c.b16 %v1105, %v1098
        %v1428 = vpack.c.b16 %v1106, %v1099
        %v1429 = vpack.c.b16 %v1107, %v1100
        %v1430 = vpack.c.b16 %v1108, %v1101
        %v1431 = vpack.c.b16 %v1116, %v1109
        %v1432 = vpack.c.b16 %v1117, %v1110
        %v1433 = vpack.c.b16 %v1118, %v1111
        %v1434 = vpack.c.b16 %v1119, %v1112
        %v1435 = vpack.c.b16 %v1120, %v1113
        %v1436 = vpack.c.b16 %v1121, %v1114
        %v1437 = vpack.c.b16 %v1122, %v1115
        %v1438 = vpack.c.b16 %v1130, %v1123
        %v1439 = vpack.c.b16 %v1131, %v1124
        %v1440 = vpack.c.b16 %v1132, %v1125
        %v1441 = vpack.c.b16 %v1133, %v1126
        %v1442 = vpack.c.b16 %v1134, %v1127
        %v1443 = vpack.c.b16 %v1135, %v1128
        %v1444 = vpack.c.b16 %v1136, %v1129
        %v1445 = vpack.c.b16 %v1144, %v1137
        %v1446 = vpack.c.b16 %v1145, %v1138
        %v1447 = vpack.c.b16 %v1146, %v1139
        %v1448 = vpack.c.b16 %v1147, %v1140
        %v1449 = vpack.c.b16 %v1148, %v1141
        %v1450 = vpack.c.b16 %v1149, %v1142
        %v1451 = vpack.c.b16 %v1150, %v1143
        %v1452 = vpack.c.b16 %v1158, %v1151
        %v1453 = vpack.c.b16 %v1159, %v1152
        %v1454 = vpack.c.b16 %v1160, %v1153
        %v1455 = vpack.c.b16 %v1161, %v1154
        %v1456 = vpack.c.b16 %v1162, %v1155
        %v1457 = vpack.c.b16 %v1163, %v1156
        %v1458 = vpack.c.b16 %v1164, %v1157
        %v1459 = vpack.c.b16 %v1172, %v1165
        %v1460 = vpack.c.b16 %v1173, %v1166
        %v1461 = vpack.c.b16 %v1174, %v1167
        %v1462 = vpack.c.b16 %v1175, %v1168
        %v1463 = vpack.c.b16 %v1176, %v1169
        %v1464 = vpack.c.b16 %v1177, %v1170
        %v1465 = vpack.c.b16 %v1178, %v1171
        %v1466 = vpack.c.b16 %v1186, %v1179
        %v1467 = vpack.c.b16 %v1187, %v1180
        %v1468 = vpack.c.b16 %v1188, %v1181
        %v1469 = vpack.c.b16 %v1189, %v1182
        %v1470 = vpack.c.b16 %v1190, %v1183
        %v1471 = vpack.c.b16 %v1191, %v1184
        %v1472 = vpack.c.b16 %v1192, %v1185
        %v1473 = vpack.c.b16 %v1200, %v1193
        %v1474 = vpack.c.b16 %v1201, %v1194
        %v1475 = vpack.c.b16 %v1202, %v1195
        %v1476 = vpack.c.b16 %v1203, %v1196
        %v1477 = vpack.c.b16 %v1204, %v1197
        %v1478 = vpack.c.b16 %v1205, %v1198
        %v1479 = vpack.c.b16 %v1206, %v1199
        %v1480 = vpack.c.b16 %v1214, %v1207
        %v1481 = vpack.c.b16 %v1215, %v1208
        %v1482 = vpack.c.b16 %v1216, %v1209
        %v1483 = vpack.c.b16 %v1217, %v1210
        %v1484 = vpack.c.b16 %v1218, %v1211
        %v1485 = vpack.c.b16 %v1219, %v1212
        %v1486 = vpack.c.b16 %v1220, %v1213
        %v1487 = vpack.c.b16 %v1228, %v1221
        %v1488 = vpack.c.b16 %v1229, %v1222
        %v1489 = vpack.c.b16 %v1230, %v1223
        %v1490 = vpack.c.b16 %v1231, %v1224
        %v1491 = vpack.c.b16 %v1232, %v1225
        %v1492 = vpack.c.b16 %v1233, %v1226
        %v1493 = vpack.c.b16 %v1234, %v1227
        %v1494 = vpack.c.b16 %v1242, %v1235
        %v1495 = vpack.c.b16 %v1243, %v1236
        %v1496 = vpack.c.b16 %v1244, %v1237
        %v1497 = vpack.c.b16 %v1245, %v1238
        %v1498 = vpack.c.b16 %v1246, %v1239
        %v1499 = vpack.c.b16 %v1247, %v1240
        %v1500 = vpack.c.b16 %v1248, %v1241
        %v1501 = vpack.c.b16 %v1256, %v1249
        %v1502 = vpack.c.b16 %v1257, %v1250
        %v1503 = vpack.c.b16 %v1258, %v1251
        %v1504 = vpack.c.b16 %v1259, %v1252
        %v1505 = vpack.c.b16 %v1260, %v1253
        %v1506 = vpack.c.b16 %v1261, %v1254
        %v1507 = vpack.c.b16 %v1262, %v1255
        %v1508 = vpack.c.b16 %v1270, %v1263
        %v1509 = vpack.c.b16 %v1271, %v1264
        %v1510 = vpack.c.b16 %v1272, %v1265
        %v1511 = vpack.c.b16 %v1273, %v1266
        %v1512 = vpack.c.b16 %v1274, %v1267
        %v1513 = vpack.c.b16 %v1275, %v1268
        %v1514 = vpack.c.b16 %v1276, %v1269
        %v1515 = vpack.c.b16 %v1284, %v1277
        %v1516 = vpack.c.b16 %v1285, %v1278
        %v1517 = vpack.c.b16 %v1286, %v1279
        %v1518 = vpack.c.b16 %v1287, %v1280
        %v1519 = vpack.c.b16 %v1288, %v1281
        %v1520 = vpack.c.b16 %v1289, %v1282
        %v1521 = vpack.c.b16 %v1290, %v1283
        %v1522 = vpack.c.b16 %v1298, %v1291
        %v1523 = vpack.c.b16 %v1299, %v1292
        %v1524 = vpack.c.b16 %v1300, %v1293
        %v1525 = vpack.c.b16 %v1301, %v1294
        %v1526 = vpack.c.b16 %v1302, %v1295
        %v1527 = vpack.c.b16 %v1303, %v1296
        %v1528 = vpack.c.b16 %v1304, %v1297
        %v1529 = vpack.c.b16 %v1312, %v1305
        %v1530 = vpack.c.b16 %v1313, %v1306
        %v1531 = vpack.c.b16 %v1314, %v1307
        %v1532 = vpack.c.b16 %v1315, %v1308
        %v1533 = vpack.c.b16 %v1316, %v1309
        %v1534 = vpack.c.b16 %v1317, %v1310
        %v1535 = vpack.c.b16 %v1318, %v1311
        %v1536 = vpack.c.b16 %v1326, %v1319
        %v1537 = vpack.c.b16 %v1327, %v1320
        %v1538 = vpack.c.b16 %v1328, %v1321
        %v1539 = vpack.c.b16 %v1329, %v1322
        %v1540 = vpack.c.b16 %v1330, %v1323
        %v1541 = vpack.c.b16 %v1331, %v1324
        %v1542 = vpack.c.b16 %v1332, %v1325
        %v1543 = vpack.c.b16 %v1340, %v1333
        %v1544 = vpack.c.b16 %v1341, %v1334
        %v1545 = vpack.c.b16 %v1342, %v1335
        %v1546 = vpack.c.b16 %v1343, %v1336
        %v1547 = vpack.c.b16 %v1344, %v1337
        %v1548 = vpack.c.b16 %v1345, %v1338
        %v1549 = vpack.c.b16 %v1346, %v1339
        %v1550 = vpack.c.b16 %v1354, %v1347
        %v1551 = vpack.c.b16 %v1355, %v1348
        %v1552 = vpack.c.b16 %v1356, %v1349
        %v1553 = vpack.c.b16 %v1357, %v1350
        %v1554 = vpack.c.b16 %v1358, %v1351
        %v1555 = vpack.c.b16 %v1359, %v1352
        %v1556 = vpack.c.b16 %v1360, %v1353
        %v1557 = vpack.c.b16 %v1368, %v1361
        %v1558 = vpack.c.b16 %v1369, %v1362
        %v1559 = vpack.c.b16 %v1370, %v1363
        %v1560 = vpack.c.b16 %v1371, %v1364
        %v1561 = vpack.c.b16 %v1372, %v1365
        %v1562 = vpack.c.b16 %v1373, %v1366
        %v1563 = vpack.c.b16 %v1374, %v1367
        %v1564 = vpack.c.b16 %v1382, %v1375
        %v1565 = vpack.c.b16 %v1383, %v1376
        %v1566 = vpack.c.b16 %v1384, %v1377
        %v1567 = vpack.c.b16 %v1385, %v1378
        %v1568 = vpack.c.b16 %v1386, %v1379
        %v1569 = vpack.c.b16 %v1387, %v1380
        %v1570 = vpack.c.b16 %v1388, %v1381
        %v1571 = vpack.c.b16 %v1396, %v1389
        %v1572 = vpack.c.b16 %v1397, %v1390
        %v1573 = vpack.c.b16 %v1398, %v1391
        %v1574 = vpack.c.b16 %v1399, %v1392
        %v1575 = vpack.c.b16 %v1400, %v1393
        %v1576 = vpack.c.b16 %v1401, %v1394
        %v1577 = vpack.c.b16 %v1402, %v1395
        %v1578 = vpack.c.b16 %v1410, %v1403
        %v1579 = vpack.c.b16 %v1411, %v1404
        %v1580 = vpack.c.b16 %v1412, %v1405
        %v1581 = vpack.c.b16 %v1413, %v1406
        %v1582 = vpack.c.b16 %v1414, %v1407
        %v1583 = vpack.c.b16 %v1415, %v1408
        %v1584 = vpack.c.b16 %v1416, %v1409
        %1753 = vmatprep.subr.bf16.mxu0 %v1418
        %1754 = vmatpush1.bf16.msra.mxu0 %v1417
        %1755 = vmatprep.subr.bf16.mxu0 %v1425
        %1756 = vmatpush1.bf16.msra.mxu0 %v1424
        %1757 = vmatprep.subr.bf16.mxu0 %v1432
        %1758 = vmatpush1.bf16.msra.mxu0 %v1431
        %1759 = vmatprep.subr.bf16.mxu0 %v1439
        %1760 = vmatpush1.bf16.msra.mxu0 %v1438
        %1761 = vmatprep.subr.bf16.mxu0 %v1446
        %1762 = vmatpush1.bf16.msra.mxu0 %v1445
        %1763 = vmatprep.subr.bf16.mxu0 %v1453
        %1764 = vmatpush1.bf16.msra.mxu0 %v1452
        %1765 = vmatprep.subr.bf16.mxu0 %v1460
        %1766 = vmatpush1.bf16.msra.mxu0 %v1459
        %1767 = vmatprep.subr.bf16.mxu0 %v1467
        %1768 = vmatpush1.bf16.msra.mxu0 %v1466
        %1769 = vmatprep.subr.bf16.mxu0 %v1474
        %1770 = vmatpush1.bf16.msra.mxu0 %v1473
        %1771 = vmatprep.subr.bf16.mxu0 %v1481
        %1772 = vmatpush1.bf16.msra.mxu0 %v1480
        %1773 = vmatprep.subr.bf16.mxu0 %v1488
        %1774 = vmatpush1.bf16.msra.mxu0 %v1487
        %1775 = vmatprep.subr.bf16.mxu0 %v1495
        %1776 = vmatpush1.bf16.msra.mxu0 %v1494
        %1777 = vmatprep.subr.bf16.mxu0 %v1502
        %1778 = vmatpush1.bf16.msra.mxu0 %v1501
        %1779 = vmatprep.subr.bf16.mxu0 %v1509
        %1780 = vmatpush1.bf16.msra.mxu0 %v1508
        %1781 = vmatprep.subr.bf16.mxu0 %v1516
        %1782 = vmatpush1.bf16.msra.mxu0 %v1515
        %1783 = vmatprep.subr.bf16.mxu0 %v1523
        %1784 = vmatpush1.bf16.msra.mxu0 %v1522
        %1785 = vmatprep.mubr.bf16.mxu0 %v637
        %1786 = vmatmul.mubr.bf16.gmra.mrb[0].mxu0 %v636
        %v1787 = vpop.f32.mrb[0].mxu0
        %v1788 = vadd.f32 %v857, %v1787
        %v1789 = vpop.f32.mrb[0].mxu0
        %v1790 = vadd.f32 %v861, %v1789
        %v1791 = vpop.f32.mrb[0].mxu0
        %v1792 = vadd.f32 %v857, %v1791
        %v1793 = vpop.f32.mrb[0].mxu0
        %v1794 = vadd.f32 %v861, %v1793
        %1795 = vmatprep.mubr.bf16.mxu0 %v640
        %1796 = vmatmul.mubr.bf16.gmra.mrb[0].mxu0 %v639
        %v1797 = vpop.f32.mrb[0].mxu0
        %v1798 = vadd.f32 %v857, %v1797
        %v1799 = vpop.f32.mrb[0].mxu0
        %v1800 = vadd.f32 %v861, %v1799
        %v1801 = vpop.f32.mrb[0].mxu0
        %v1802 = vadd.f32 %v857, %v1801
        %v1803 = vpop.f32.mrb[0].mxu0
        %v1804 = vadd.f32 %v861, %v1803
        %1805 = vmatprep.mubr.bf16.mxu0 %v643
        %1806 = vmatmul.mubr.bf16.gmra.mrb[0].mxu0 %v642
        %v1807 = vpop.f32.mrb[0].mxu0
        %v1808 = vadd.f32 %v857, %v1807
        %v1809 = vpop.f32.mrb[0].mxu0
        %v1810 = vadd.f32 %v861, %v1809
        %v1811 = vpop.f32.mrb[0].mxu0
        %v1812 = vadd.f32 %v857, %v1811
        %v1813 = vpop.f32.mrb[0].mxu0
        %v1814 = vadd.f32 %v861, %v1813
        %1815 = vmatprep.mubr.bf16.mxu0 %v646
        %1816 = vmatmul.mubr.bf16.gmra.mrb[0].mxu0 %v645
        %v1817 = vpop.f32.mrb[0].mxu0
        %v1818 = vadd.f32 %v857, %v1817
        %v1819 = vpop.f32.mrb[0].mxu0
        %v1820 = vadd.f32 %v861, %v1819
        %v1821 = vpop.f32.mrb[0].mxu0
        %v1822 = vadd.f32 %v857, %v1821
        %v1823 = vpop.f32.mrb[0].mxu0
        %v1824 = vadd.f32 %v861, %v1823
        %1825 = vmatprep.mubr.bf16.mxu0 %v649
        %1826 = vmatmul.mubr.bf16.gmra.mrb[0].mxu0 %v648
        %v1827 = vpop.f32.mrb[0].mxu0
        %v1828 = vadd.f32 %v857, %v1827
        %v1829 = vpop.f32.mrb[0].mxu0
        %v1830 = vadd.f32 %v861, %v1829
        %v1831 = vpop.f32.mrb[0].mxu0
        %v1832 = vadd.f32 %v857, %v1831
        %v1833 = vpop.f32.mrb[0].mxu0
        %v1834 = vadd.f32 %v861, %v1833
        %1835 = vmatprep.mubr.bf16.mxu0 %v652
        %1836 = vmatmul.mubr.bf16.gmra.mrb[0].mxu0 %v651
        %v1837 = vpop.f32.mrb[0].mxu0
        %v1838 = vadd.f32 %v857, %v1837
        %v1839 = vpop.f32.mrb[0].mxu0
        %v1840 = vadd.f32 %v861, %v1839
        %v1841 = vpop.f32.mrb[0].mxu0
        %v1842 = vadd.f32 %v857, %v1841
        %v1843 = vpop.f32.mrb[0].mxu0
        %v1844 = vadd.f32 %v861, %v1843
        %1845 = vmatprep.mubr.bf16.mxu0 %v655
        %1846 = vmatmul.mubr.bf16.gmra.mrb[0].mxu0 %v654
        %v1847 = vpop.f32.mrb[0].mxu0
        %v1848 = vadd.f32 %v857, %v1847
        %v1849 = vpop.f32.mrb[0].mxu0
        %v1850 = vadd.f32 %v861, %v1849
        %v1851 = vpop.f32.mrb[0].mxu0
        %v1852 = vadd.f32 %v857, %v1851
        %v1853 = vpop.f32.mrb[0].mxu0
        %v1854 = vadd.f32 %v861, %v1853
        %1855 = vmatprep.mubr.bf16.mxu0 %v658
        %1856 = vmatmul.mubr.bf16.gmra.mrb[0].mxu0 %v657
        %v1857 = vpop.f32.mrb[0].mxu0
        %v1858 = vadd.f32 %v857, %v1857
        %v1859 = vpop.f32.mrb[0].mxu0
        %v1860 = vadd.f32 %v861, %v1859
        %v1861 = vpop.f32.mrb[0].mxu0
        %v1862 = vadd.f32 %v857, %v1861
        %v1863 = vpop.f32.mrb[0].mxu0
        %v1864 = vadd.f32 %v861, %v1863
        %1865 = vdwg.mxu0
        %1866 = vmatprep.subr.bf16.mxu0 %v1530
        %1867 = vmatpush1.bf16.msra.mxu0 %v1529
        %1868 = vmatprep.subr.bf16.mxu0 %v1537
        %1869 = vmatpush1.bf16.msra.mxu0 %v1536
        %1870 = vmatprep.subr.bf16.mxu0 %v1544
        %1871 = vmatpush1.bf16.msra.mxu0 %v1543
        %1872 = vmatprep.subr.bf16.mxu0 %v1551
        %1873 = vmatpush1.bf16.msra.mxu0 %v1550
        %1874 = vmatprep.subr.bf16.mxu0 %v1558
        %1875 = vmatpush1.bf16.msra.mxu0 %v1557
        %1876 = vmatprep.subr.bf16.mxu0 %v1565
        %1877 = vmatpush1.bf16.msra.mxu0 %v1564
        %1878 = vmatprep.subr.bf16.mxu0 %v1572
        %1879 = vmatpush1.bf16.msra.mxu0 %v1571
        %1880 = vmatprep.subr.bf16.mxu0 %v1579
        %1881 = vmatpush1.bf16.msra.mxu0 %v1578
        %1882 = vmatprep.subr.bf16.mxu0 0
        %1883 = vmatpush1.bf16.msra.mxu0 0
        %1884 = vmatprep.subr.bf16.mxu0 0
        %1885 = vmatpush1.bf16.msra.mxu0 0
        %1886 = vmatprep.subr.bf16.mxu0 0
        %1887 = vmatpush1.bf16.msra.mxu0 0
        %1888 = vmatprep.subr.bf16.mxu0 0
        %1889 = vmatpush1.bf16.msra.mxu0 0
        %1890 = vmatprep.subr.bf16.mxu0 0
        %1891 = vmatpush1.bf16.msra.mxu0 0
        %1892 = vmatprep.subr.bf16.mxu0 0
        %1893 = vmatpush1.bf16.msra.mxu0 0
        %1894 = vmatprep.subr.bf16.mxu0 0
        %1895 = vmatpush1.bf16.msra.mxu0 0
        %1896 = vmatprep.subr.bf16.mxu0 0
        %1897 = vmatpush1.bf16.msra.mxu0 0
        %1898 = vmatprep.mubr.bf16.mxu0 0
        %1899 = vmatmul.mubr.bf16.gmra.mrb[0].mxu0 %v638
        %v1900 = vpop.f32.mrb[0].mxu0
        %v1901 = vadd.f32 %v1788, %v1900
        %v1902 = vpop.f32.mrb[0].mxu0
        %v1903 = vadd.f32 %v1790, %v1902
        %v1904 = vpop.f32.mrb[0].mxu0
        %v1905 = vadd.f32 %v1792, %v1904
        %v1906 = vpop.f32.mrb[0].mxu0
        %v1907 = vadd.f32 %v1794, %v1906
        %1908 = vmatprep.mubr.bf16.mxu0 0
        %1909 = vmatmul.mubr.bf16.gmra.mrb[0].mxu0 %v641
        %v1910 = vpop.f32.mrb[0].mxu0
        %v1911 = vadd.f32 %v1798, %v1910
        %v1912 = vpop.f32.mrb[0].mxu0
        %v1913 = vadd.f32 %v1800, %v1912
        %v1914 = vpop.f32.mrb[0].mxu0
        %v1915 = vadd.f32 %v1802, %v1914
        %v1916 = vpop.f32.mrb[0].mxu0
        %v1917 = vadd.f32 %v1804, %v1916
        %1918 = vmatprep.mubr.bf16.mxu0 0
        %1919 = vmatmul.mubr.bf16.gmra.mrb[0].mxu0 %v644
        %v1920 = vpop.f32.mrb[0].mxu0
        %v1921 = vadd.f32 %v1808, %v1920
        %v1922 = vpop.f32.mrb[0].mxu0
        %v1923 = vadd.f32 %v1810, %v1922
        %v1924 = vpop.f32.mrb[0].mxu0
        %v1925 = vadd.f32 %v1812, %v1924
        %v1926 = vpop.f32.mrb[0].mxu0
        %v1927 = vadd.f32 %v1814, %v1926
        %1928 = vmatprep.mubr.bf16.mxu0 0
        %1929 = vmatmul.mubr.bf16.gmra.mrb[0].mxu0 %v647
        %v1930 = vpop.f32.mrb[0].mxu0
        %v1931 = vadd.f32 %v1818, %v1930
        %v1932 = vpop.f32.mrb[0].mxu0
        %v1933 = vadd.f32 %v1820, %v1932
        %v1934 = vpop.f32.mrb[0].mxu0
        %v1935 = vadd.f32 %v1822, %v1934
        %v1936 = vpop.f32.mrb[0].mxu0
        %v1937 = vadd.f32 %v1824, %v1936
        %1938 = vmatprep.mubr.bf16.mxu0 0
        %1939 = vmatmul.mubr.bf16.gmra.mrb[0].mxu0 %v650
        %v1940 = vpop.f32.mrb[0].mxu0
        %v1941 = vadd.f32 %v1828, %v1940
        %v1942 = vpop.f32.mrb[0].mxu0
        %v1943 = vadd.f32 %v1830, %v1942
        %v1944 = vpop.f32.mrb[0].mxu0
        %v1945 = vadd.f32 %v1832, %v1944
        %v1946 = vpop.f32.mrb[0].mxu0
        %v1947 = vadd.f32 %v1834, %v1946
        %1948 = vmatprep.mubr.bf16.mxu0 0
        %1949 = vmatmul.mubr.bf16.gmra.mrb[0].mxu0 %v653
        %v1950 = vpop.f32.mrb[0].mxu0
        %v1951 = vadd.f32 %v1838, %v1950
        %v1952 = vpop.f32.mrb[0].mxu0
        %v1953 = vadd.f32 %v1840, %v1952
        %v1954 = vpop.f32.mrb[0].mxu0
        %v1955 = vadd.f32 %v1842, %v1954
        %v1956 = vpop.f32.mrb[0].mxu0
        %v1957 = vadd.f32 %v1844, %v1956
        %1958 = vmatprep.mubr.bf16.mxu0 0
        %1959 = vmatmul.mubr.bf16.gmra.mrb[0].mxu0 %v656
        %v1960 = vpop.f32.mrb[0].mxu0
        %v1961 = vadd.f32 %v1848, %v1960
        %v1962 = vpop.f32.mrb[0].mxu0
        %v1963 = vadd.f32 %v1850, %v1962
        %v1964 = vpop.f32.mrb[0].mxu0
        %v1965 = vadd.f32 %v1852, %v1964
        %v1966 = vpop.f32.mrb[0].mxu0
        %v1967 = vadd.f32 %v1854, %v1966
        %1968 = vmatprep.mubr.bf16.mxu0 0
        %1969 = vmatmul.mubr.bf16.gmra.mrb[0].mxu0 %v659
        %v1970 = vpop.f32.mrb[0].mxu0
        %v1971 = vadd.f32 %v1858, %v1970
        %v1972 = vpop.f32.mrb[0].mxu0
        %v1973 = vadd.f32 %v1860, %v1972
        %v1974 = vpop.f32.mrb[0].mxu0
        %v1975 = vadd.f32 %v1862, %v1974
        %v1976 = vpop.f32.mrb[0].mxu0
        %v1977 = vadd.f32 %v1864, %v1976
        %1978 = vdwg.mxu0
        %1979 = vmatprep.subr.bf16.mxu0 %v1420
        %1980 = vmatpush1.bf16.msra.mxu0 %v1419
        %1981 = vmatprep.subr.bf16.mxu0 %v1427
        %1982 = vmatpush1.bf16.msra.mxu0 %v1426
        %1983 = vmatprep.subr.bf16.mxu0 %v1434
        %1984 = vmatpush1.bf16.msra.mxu0 %v1433
        %1985 = vmatprep.subr.bf16.mxu0 %v1441
        %1986 = vmatpush1.bf16.msra.mxu0 %v1440
        %1987 = vmatprep.subr.bf16.mxu0 %v1448
        %1988 = vmatpush1.bf16.msra.mxu0 %v1447
        %1989 = vmatprep.subr.bf16.mxu0 %v1455
        %1990 = vmatpush1.bf16.msra.mxu0 %v1454
        %1991 = vmatprep.subr.bf16.mxu0 %v1462
        %1992 = vmatpush1.bf16.msra.mxu0 %v1461
        %1993 = vmatprep.subr.bf16.mxu0 %v1469
        %1994 = vmatpush1.bf16.msra.mxu0 %v1468
        %1995 = vmatprep.subr.bf16.mxu0 %v1476
        %1996 = vmatpush1.bf16.msra.mxu0 %v1475
        %1997 = vmatprep.subr.bf16.mxu0 %v1483
        %1998 = vmatpush1.bf16.msra.mxu0 %v1482
        %1999 = vmatprep.subr.bf16.mxu0 %v1490
        %2000 = vmatpush1.bf16.msra.mxu0 %v1489
        %2001 = vmatprep.subr.bf16.mxu0 %v1497
        %2002 = vmatpush1.bf16.msra.mxu0 %v1496
        %2003 = vmatprep.subr.bf16.mxu0 %v1504
        %2004 = vmatpush1.bf16.msra.mxu0 %v1503
        %2005 = vmatprep.subr.bf16.mxu0 %v1511
        %2006 = vmatpush1.bf16.msra.mxu0 %v1510
        %2007 = vmatprep.subr.bf16.mxu0 %v1518
        %2008 = vmatpush1.bf16.msra.mxu0 %v1517
        %2009 = vmatprep.subr.bf16.mxu0 %v1525
        %2010 = vmatpush1.bf16.msra.mxu0 %v1524
        %2011 = vmatprep.mubr.bf16.mxu0 %v637
        %2012 = vmatmul.mubr.bf16.gmra.mrb[0].mxu0 %v636
        %v2013 = vpop.f32.mrb[0].mxu0
        %v2014 = vadd.f32 %v865, %v2013
        %v2015 = vpop.f32.mrb[0].mxu0
        %v2016 = vadd.f32 %v869, %v2015
        %v2017 = vpop.f32.mrb[0].mxu0
        %v2018 = vadd.f32 %v865, %v2017
        %v2019 = vpop.f32.mrb[0].mxu0
        %v2020 = vadd.f32 %v869, %v2019
        %2021 = vmatprep.mubr.bf16.mxu0 %v640
        %2022 = vmatmul.mubr.bf16.gmra.mrb[0].mxu0 %v639
        %v2023 = vpop.f32.mrb[0].mxu0
        %v2024 = vadd.f32 %v865, %v2023
        %v2025 = vpop.f32.mrb[0].mxu0
        %v2026 = vadd.f32 %v869, %v2025
        %v2027 = vpop.f32.mrb[0].mxu0
        %v2028 = vadd.f32 %v865, %v2027
        %v2029 = vpop.f32.mrb[0].mxu0
        %v2030 = vadd.f32 %v869, %v2029
        %2031 = vmatprep.mubr.bf16.mxu0 %v643
        %2032 = vmatmul.mubr.bf16.gmra.mrb[0].mxu0 %v642
        %v2033 = vpop.f32.mrb[0].mxu0
        %v2034 = vadd.f32 %v865, %v2033
        %v2035 = vpop.f32.mrb[0].mxu0
        %v2036 = vadd.f32 %v869, %v2035
        %v2037 = vpop.f32.mrb[0].mxu0
        %v2038 = vadd.f32 %v865, %v2037
        %v2039 = vpop.f32.mrb[0].mxu0
        %v2040 = vadd.f32 %v869, %v2039
        %2041 = vmatprep.mubr.bf16.mxu0 %v646
        %2042 = vmatmul.mubr.bf16.gmra.mrb[0].mxu0 %v645
        %v2043 = vpop.f32.mrb[0].mxu0
        %v2044 = vadd.f32 %v865, %v2043
        %v2045 = vpop.f32.mrb[0].mxu0
        %v2046 = vadd.f32 %v869, %v2045
        %v2047 = vpop.f32.mrb[0].mxu0
        %v2048 = vadd.f32 %v865, %v2047
        %v2049 = vpop.f32.mrb[0].mxu0
        %v2050 = vadd.f32 %v869, %v2049
        %2051 = vmatprep.mubr.bf16.mxu0 %v649
        %2052 = vmatmul.mubr.bf16.gmra.mrb[0].mxu0 %v648
        %v2053 = vpop.f32.mrb[0].mxu0
        %v2054 = vadd.f32 %v865, %v2053
        %v2055 = vpop.f32.mrb[0].mxu0
        %v2056 = vadd.f32 %v869, %v2055
        %v2057 = vpop.f32.mrb[0].mxu0
        %v2058 = vadd.f32 %v865, %v2057
        %v2059 = vpop.f32.mrb[0].mxu0
        %v2060 = vadd.f32 %v869, %v2059
        %2061 = vmatprep.mubr.bf16.mxu0 %v652
        %2062 = vmatmul.mubr.bf16.gmra.mrb[0].mxu0 %v651
        %v2063 = vpop.f32.mrb[0].mxu0
        %v2064 = vadd.f32 %v865, %v2063
        %v2065 = vpop.f32.mrb[0].mxu0
        %v2066 = vadd.f32 %v869, %v2065
        %v2067 = vpop.f32.mrb[0].mxu0
        %v2068 = vadd.f32 %v865, %v2067
        %v2069 = vpop.f32.mrb[0].mxu0
        %v2070 = vadd.f32 %v869, %v2069
        %2071 = vmatprep.mubr.bf16.mxu0 %v655
        %2072 = vmatmul.mubr.bf16.gmra.mrb[0].mxu0 %v654
        %v2073 = vpop.f32.mrb[0].mxu0
        %v2074 = vadd.f32 %v865, %v2073
        %v2075 = vpop.f32.mrb[0].mxu0
        %v2076 = vadd.f32 %v869, %v2075
        %v2077 = vpop.f32.mrb[0].mxu0
        %v2078 = vadd.f32 %v865, %v2077
        %v2079 = vpop.f32.mrb[0].mxu0
        %v2080 = vadd.f32 %v869, %v2079
        %2081 = vmatprep.mubr.bf16.mxu0 %v658
        %2082 = vmatmul.mubr.bf16.gmra.mrb[0].mxu0 %v657
        %v2083 = vpop.f32.mrb[0].mxu0
        %v2084 = vadd.f32 %v865, %v2083
        %v2085 = vpop.f32.mrb[0].mxu0
        %v2086 = vadd.f32 %v869, %v2085
        %v2087 = vpop.f32.mrb[0].mxu0
        %v2088 = vadd.f32 %v865, %v2087
        %v2089 = vpop.f32.mrb[0].mxu0
        %v2090 = vadd.f32 %v869, %v2089
        %2091 = vdwg.mxu0
        %2092 = vmatprep.subr.bf16.mxu0 %v1532
        %2093 = vmatpush1.bf16.msra.mxu0 %v1531
        %2094 = vmatprep.subr.bf16.mxu0 %v1539
        %2095 = vmatpush1.bf16.msra.mxu0 %v1538
        %2096 = vmatprep.subr.bf16.mxu0 %v1546
        %2097 = vmatpush1.bf16.msra.mxu0 %v1545
        %2098 = vmatprep.subr.bf16.mxu0 %v1553
        %2099 = vmatpush1.bf16.msra.mxu0 %v1552
        %2100 = vmatprep.subr.bf16.mxu0 %v1560
        %2101 = vmatpush1.bf16.msra.mxu0 %v1559
        %2102 = vmatprep.subr.bf16.mxu0 %v1567
        %2103 = vmatpush1.bf16.msra.mxu0 %v1566
        %2104 = vmatprep.subr.bf16.mxu0 %v1574
        %2105 = vmatpush1.bf16.msra.mxu0 %v1573
        %2106 = vmatprep.subr.bf16.mxu0 %v1581
        %2107 = vmatpush1.bf16.msra.mxu0 %v1580
        %2108 = vmatprep.subr.bf16.mxu0 0
        %2109 = vmatpush1.bf16.msra.mxu0 0
        %2110 = vmatprep.subr.bf16.mxu0 0
        %2111 = vmatpush1.bf16.msra.mxu0 0
        %2112 = vmatprep.subr.bf16.mxu0 0
        %2113 = vmatpush1.bf16.msra.mxu0 0
        %2114 = vmatprep.subr.bf16.mxu0 0
        %2115 = vmatpush1.bf16.msra.mxu0 0
        %2116 = vmatprep.subr.bf16.mxu0 0
        %2117 = vmatpush1.bf16.msra.mxu0 0
        %2118 = vmatprep.subr.bf16.mxu0 0
        %2119 = vmatpush1.bf16.msra.mxu0 0
        %2120 = vmatprep.subr.bf16.mxu0 0
        %2121 = vmatpush1.bf16.msra.mxu0 0
        %2122 = vmatprep.subr.bf16.mxu0 0
        %2123 = vmatpush1.bf16.msra.mxu0 0
        %2124 = vmatprep.mubr.bf16.mxu0 0
        %2125 = vmatmul.mubr.bf16.gmra.mrb[0].mxu0 %v638
        %v2126 = vpop.f32.mrb[0].mxu0
        %v2127 = vadd.f32 %v2014, %v2126
        %v2128 = vpop.f32.mrb[0].mxu0
        %v2129 = vadd.f32 %v2016, %v2128
        %v2130 = vpop.f32.mrb[0].mxu0
        %v2131 = vadd.f32 %v2018, %v2130
        %v2132 = vpop.f32.mrb[0].mxu0
        %v2133 = vadd.f32 %v2020, %v2132
        %2134 = vmatprep.mubr.bf16.mxu0 0
        %2135 = vmatmul.mubr.bf16.gmra.mrb[0].mxu0 %v641
        %v2136 = vpop.f32.mrb[0].mxu0
        %v2137 = vadd.f32 %v2024, %v2136
        %v2138 = vpop.f32.mrb[0].mxu0
        %v2139 = vadd.f32 %v2026, %v2138
        %v2140 = vpop.f32.mrb[0].mxu0
        %v2141 = vadd.f32 %v2028, %v2140
        %v2142 = vpop.f32.mrb[0].mxu0
        %v2143 = vadd.f32 %v2030, %v2142
        %2144 = vmatprep.mubr.bf16.mxu0 0
        %2145 = vmatmul.mubr.bf16.gmra.mrb[0].mxu0 %v644
        %v2146 = vpop.f32.mrb[0].mxu0
        %v2147 = vadd.f32 %v2034, %v2146
        %v2148 = vpop.f32.mrb[0].mxu0
        %v2149 = vadd.f32 %v2036, %v2148
        %v2150 = vpop.f32.mrb[0].mxu0
        %v2151 = vadd.f32 %v2038, %v2150
        %v2152 = vpop.f32.mrb[0].mxu0
        %v2153 = vadd.f32 %v2040, %v2152
        %2154 = vmatprep.mubr.bf16.mxu0 0
        %2155 = vmatmul.mubr.bf16.gmra.mrb[0].mxu0 %v647
        %v2156 = vpop.f32.mrb[0].mxu0
        %v2157 = vadd.f32 %v2044, %v2156
        %v2158 = vpop.f32.mrb[0].mxu0
        %v2159 = vadd.f32 %v2046, %v2158
        %v2160 = vpop.f32.mrb[0].mxu0
        %v2161 = vadd.f32 %v2048, %v2160
        %v2162 = vpop.f32.mrb[0].mxu0
        %v2163 = vadd.f32 %v2050, %v2162
        %2164 = vmatprep.mubr.bf16.mxu0 0
        %2165 = vmatmul.mubr.bf16.gmra.mrb[0].mxu0 %v650
        %v2166 = vpop.f32.mrb[0].mxu0
        %v2167 = vadd.f32 %v2054, %v2166
        %v2168 = vpop.f32.mrb[0].mxu0
        %v2169 = vadd.f32 %v2056, %v2168
        %v2170 = vpop.f32.mrb[0].mxu0
        %v2171 = vadd.f32 %v2058, %v2170
        %v2172 = vpop.f32.mrb[0].mxu0
        %v2173 = vadd.f32 %v2060, %v2172
        %2174 = vmatprep.mubr.bf16.mxu0 0
        %2175 = vmatmul.mubr.bf16.gmra.mrb[0].mxu0 %v653
        %v2176 = vpop.f32.mrb[0].mxu0
        %v2177 = vadd.f32 %v2064, %v2176
        %v2178 = vpop.f32.mrb[0].mxu0
        %v2179 = vadd.f32 %v2066, %v2178
        %v2180 = vpop.f32.mrb[0].mxu0
        %v2181 = vadd.f32 %v2068, %v2180
        %v2182 = vpop.f32.mrb[0].mxu0
        %v2183 = vadd.f32 %v2070, %v2182
        %2184 = vmatprep.mubr.bf16.mxu0 0
        %2185 = vmatmul.mubr.bf16.gmra.mrb[0].mxu0 %v656
        %v2186 = vpop.f32.mrb[0].mxu0
        %v2187 = vadd.f32 %v2074, %v2186
        %v2188 = vpop.f32.mrb[0].mxu0
        %v2189 = vadd.f32 %v2076, %v2188
        %v2190 = vpop.f32.mrb[0].mxu0
        %v2191 = vadd.f32 %v2078, %v2190
        %v2192 = vpop.f32.mrb[0].mxu0
        %v2193 = vadd.f32 %v2080, %v2192
        %2194 = vmatprep.mubr.bf16.mxu0 0
        %2195 = vmatmul.mubr.bf16.gmra.mrb[0].mxu0 %v659
        %v2196 = vpop.f32.mrb[0].mxu0
        %v2197 = vadd.f32 %v2084, %v2196
        %v2198 = vpop.f32.mrb[0].mxu0
        %v2199 = vadd.f32 %v2086, %v2198
        %v2200 = vpop.f32.mrb[0].mxu0
        %v2201 = vadd.f32 %v2088, %v2200
        %v2202 = vpop.f32.mrb[0].mxu0
        %v2203 = vadd.f32 %v2090, %v2202
        %2204 = vdwg.mxu0
        %2205 = vmatprep.subr.bf16.mxu0 %v1422
        %2206 = vmatpush1.bf16.msra.mxu0 %v1421
        %2207 = vmatprep.subr.bf16.mxu0 %v1429
        %2208 = vmatpush1.bf16.msra.mxu0 %v1428
        %2209 = vmatprep.subr.bf16.mxu0 %v1436
        %2210 = vmatpush1.bf16.msra.mxu0 %v1435
        %2211 = vmatprep.subr.bf16.mxu0 %v1443
        %2212 = vmatpush1.bf16.msra.mxu0 %v1442
        %2213 = vmatprep.subr.bf16.mxu0 %v1450
        %2214 = vmatpush1.bf16.msra.mxu0 %v1449
        %2215 = vmatprep.subr.bf16.mxu0 %v1457
        %2216 = vmatpush1.bf16.msra.mxu0 %v1456
        %2217 = vmatprep.subr.bf16.mxu0 %v1464
        %2218 = vmatpush1.bf16.msra.mxu0 %v1463
        %2219 = vmatprep.subr.bf16.mxu0 %v1471
        %2220 = vmatpush1.bf16.msra.mxu0 %v1470
        %2221 = vmatprep.subr.bf16.mxu0 %v1478
        %2222 = vmatpush1.bf16.msra.mxu0 %v1477
        %2223 = vmatprep.subr.bf16.mxu0 %v1485
        %2224 = vmatpush1.bf16.msra.mxu0 %v1484
        %2225 = vmatprep.subr.bf16.mxu0 %v1492
        %2226 = vmatpush1.bf16.msra.mxu0 %v1491
        %2227 = vmatprep.subr.bf16.mxu0 %v1499
        %2228 = vmatpush1.bf16.msra.mxu0 %v1498
        %2229 = vmatprep.subr.bf16.mxu0 %v1506
        %2230 = vmatpush1.bf16.msra.mxu0 %v1505
        %2231 = vmatprep.subr.bf16.mxu0 %v1513
        %2232 = vmatpush1.bf16.msra.mxu0 %v1512
        %2233 = vmatprep.subr.bf16.mxu0 %v1520
        %2234 = vmatpush1.bf16.msra.mxu0 %v1519
        %2235 = vmatprep.subr.bf16.mxu0 %v1527
        %2236 = vmatpush1.bf16.msra.mxu0 %v1526
        %2237 = vmatprep.mubr.bf16.mxu0 %v637
        %2238 = vmatmul.mubr.bf16.gmra.mrb[0].mxu0 %v636
        %v2239 = vpop.f32.mrb[0].mxu0
        %v2240 = vadd.f32 %v873, %v2239
        %v2241 = vpop.f32.mrb[0].mxu0
        %v2242 = vadd.f32 %v877, %v2241
        %v2243 = vpop.f32.mrb[0].mxu0
        %v2244 = vadd.f32 %v873, %v2243
        %v2245 = vpop.f32.mrb[0].mxu0
        %v2246 = vadd.f32 %v877, %v2245
        %2247 = vmatprep.mubr.bf16.mxu0 %v640
        %2248 = vmatmul.mubr.bf16.gmra.mrb[0].mxu0 %v639
        %v2249 = vpop.f32.mrb[0].mxu0
        %v2250 = vadd.f32 %v873, %v2249
        %v2251 = vpop.f32.mrb[0].mxu0
        %v2252 = vadd.f32 %v877, %v2251
        %v2253 = vpop.f32.mrb[0].mxu0
        %v2254 = vadd.f32 %v873, %v2253
        %v2255 = vpop.f32.mrb[0].mxu0
        %v2256 = vadd.f32 %v877, %v2255
        %2257 = vmatprep.mubr.bf16.mxu0 %v643
        %2258 = vmatmul.mubr.bf16.gmra.mrb[0].mxu0 %v642
        %v2259 = vpop.f32.mrb[0].mxu0
        %v2260 = vadd.f32 %v873, %v2259
        %v2261 = vpop.f32.mrb[0].mxu0
        %v2262 = vadd.f32 %v877, %v2261
        %v2263 = vpop.f32.mrb[0].mxu0
        %v2264 = vadd.f32 %v873, %v2263
        %v2265 = vpop.f32.mrb[0].mxu0
        %v2266 = vadd.f32 %v877, %v2265
        %2267 = vmatprep.mubr.bf16.mxu0 %v646
        %2268 = vmatmul.mubr.bf16.gmra.mrb[0].mxu0 %v645
        %v2269 = vpop.f32.mrb[0].mxu0
        %v2270 = vadd.f32 %v873, %v2269
        %v2271 = vpop.f32.mrb[0].mxu0
        %v2272 = vadd.f32 %v877, %v2271
        %v2273 = vpop.f32.mrb[0].mxu0
        %v2274 = vadd.f32 %v873, %v2273
        %v2275 = vpop.f32.mrb[0].mxu0
        %v2276 = vadd.f32 %v877, %v2275
        %2277 = vmatprep.mubr.bf16.mxu0 %v649
        %2278 = vmatmul.mubr.bf16.gmra.mrb[0].mxu0 %v648
        %v2279 = vpop.f32.mrb[0].mxu0
        %v2280 = vadd.f32 %v873, %v2279
        %v2281 = vpop.f32.mrb[0].mxu0
        %v2282 = vadd.f32 %v877, %v2281
        %v2283 = vpop.f32.mrb[0].mxu0
        %v2284 = vadd.f32 %v873, %v2283
        %v2285 = vpop.f32.mrb[0].mxu0
        %v2286 = vadd.f32 %v877, %v2285
        %2287 = vmatprep.mubr.bf16.mxu0 %v652
        %2288 = vmatmul.mubr.bf16.gmra.mrb[0].mxu0 %v651
        %v2289 = vpop.f32.mrb[0].mxu0
        %v2290 = vadd.f32 %v873, %v2289
        %v2291 = vpop.f32.mrb[0].mxu0
        %v2292 = vadd.f32 %v877, %v2291
        %v2293 = vpop.f32.mrb[0].mxu0
        %v2294 = vadd.f32 %v873, %v2293
        %v2295 = vpop.f32.mrb[0].mxu0
        %v2296 = vadd.f32 %v877, %v2295
        %2297 = vmatprep.mubr.bf16.mxu0 %v655
        %2298 = vmatmul.mubr.bf16.gmra.mrb[0].mxu0 %v654
        %v2299 = vpop.f32.mrb[0].mxu0
        %v2300 = vadd.f32 %v873, %v2299
        %v2301 = vpop.f32.mrb[0].mxu0
        %v2302 = vadd.f32 %v877, %v2301
        %v2303 = vpop.f32.mrb[0].mxu0
        %v2304 = vadd.f32 %v873, %v2303
        %v2305 = vpop.f32.mrb[0].mxu0
        %v2306 = vadd.f32 %v877, %v2305
        %2307 = vmatprep.mubr.bf16.mxu0 %v658
        %2308 = vmatmul.mubr.bf16.gmra.mrb[0].mxu0 %v657
        %v2309 = vpop.f32.mrb[0].mxu0
        %v2310 = vadd.f32 %v873, %v2309
        %v2311 = vpop.f32.mrb[0].mxu0
        %v2312 = vadd.f32 %v877, %v2311
        %v2313 = vpop.f32.mrb[0].mxu0
        %v2314 = vadd.f32 %v873, %v2313
        %v2315 = vpop.f32.mrb[0].mxu0
        %v2316 = vadd.f32 %v877, %v2315
        %2317 = vdwg.mxu0
        %2318 = vmatprep.subr.bf16.mxu0 %v1534
        %2319 = vmatpush1.bf16.msra.mxu0 %v1533
        %2320 = vmatprep.subr.bf16.mxu0 %v1541
        %2321 = vmatpush1.bf16.msra.mxu0 %v1540
        %2322 = vmatprep.subr.bf16.mxu0 %v1548
        %2323 = vmatpush1.bf16.msra.mxu0 %v1547
        %2324 = vmatprep.subr.bf16.mxu0 %v1555
        %2325 = vmatpush1.bf16.msra.mxu0 %v1554
        %2326 = vmatprep.subr.bf16.mxu0 %v1562
        %2327 = vmatpush1.bf16.msra.mxu0 %v1561
        %2328 = vmatprep.subr.bf16.mxu0 %v1569
        %2329 = vmatpush1.bf16.msra.mxu0 %v1568
        %2330 = vmatprep.subr.bf16.mxu0 %v1576
        %2331 = vmatpush1.bf16.msra.mxu0 %v1575
        %2332 = vmatprep.subr.bf16.mxu0 %v1583
        %2333 = vmatpush1.bf16.msra.mxu0 %v1582
        %2334 = vmatprep.subr.bf16.mxu0 0
        %2335 = vmatpush1.bf16.msra.mxu0 0
        %2336 = vmatprep.subr.bf16.mxu0 0
        %2337 = vmatpush1.bf16.msra.mxu0 0
        %2338 = vmatprep.subr.bf16.mxu0 0
        %2339 = vmatpush1.bf16.msra.mxu0 0
        %2340 = vmatprep.subr.bf16.mxu0 0
        %2341 = vmatpush1.bf16.msra.mxu0 0
        %2342 = vmatprep.subr.bf16.mxu0 0
        %2343 = vmatpush1.bf16.msra.mxu0 0
        %2344 = vmatprep.subr.bf16.mxu0 0
        %2345 = vmatpush1.bf16.msra.mxu0 0
        %2346 = vmatprep.subr.bf16.mxu0 0
        %2347 = vmatpush1.bf16.msra.mxu0 0
        %2348 = vmatprep.subr.bf16.mxu0 0
        %2349 = vmatpush1.bf16.msra.mxu0 0
        %2350 = vmatprep.mubr.bf16.mxu0 0
        %2351 = vmatmul.mubr.bf16.gmra.mrb[0].mxu0 %v638
        %v2352 = vpop.f32.mrb[0].mxu0
        %v2353 = vadd.f32 %v2240, %v2352
        %v2354 = vpop.f32.mrb[0].mxu0
        %v2355 = vadd.f32 %v2242, %v2354
        %v2356 = vpop.f32.mrb[0].mxu0
        %v2357 = vadd.f32 %v2244, %v2356
        %v2358 = vpop.f32.mrb[0].mxu0
        %v2359 = vadd.f32 %v2246, %v2358
        %2360 = vmatprep.mubr.bf16.mxu0 0
        %2361 = vmatmul.mubr.bf16.gmra.mrb[0].mxu0 %v641
        %v2362 = vpop.f32.mrb[0].mxu0
        %v2363 = vadd.f32 %v2250, %v2362
        %v2364 = vpop.f32.mrb[0].mxu0
        %v2365 = vadd.f32 %v2252, %v2364
        %v2366 = vpop.f32.mrb[0].mxu0
        %v2367 = vadd.f32 %v2254, %v2366
        %v2368 = vpop.f32.mrb[0].mxu0
        %v2369 = vadd.f32 %v2256, %v2368
        %2370 = vmatprep.mubr.bf16.mxu0 0
        %2371 = vmatmul.mubr.bf16.gmra.mrb[0].mxu0 %v644
        %v2372 = vpop.f32.mrb[0].mxu0
        %v2373 = vadd.f32 %v2260, %v2372
        %v2374 = vpop.f32.mrb[0].mxu0
        %v2375 = vadd.f32 %v2262, %v2374
        %v2376 = vpop.f32.mrb[0].mxu0
        %v2377 = vadd.f32 %v2264, %v2376
        %v2378 = vpop.f32.mrb[0].mxu0
        %v2379 = vadd.f32 %v2266, %v2378
        %2380 = vmatprep.mubr.bf16.mxu0 0
        %2381 = vmatmul.mubr.bf16.gmra.mrb[0].mxu0 %v647
        %v2382 = vpop.f32.mrb[0].mxu0
        %v2383 = vadd.f32 %v2270, %v2382
        %v2384 = vpop.f32.mrb[0].mxu0
        %v2385 = vadd.f32 %v2272, %v2384
        %v2386 = vpop.f32.mrb[0].mxu0
        %v2387 = vadd.f32 %v2274, %v2386
        %v2388 = vpop.f32.mrb[0].mxu0
        %v2389 = vadd.f32 %v2276, %v2388
        %2390 = vmatprep.mubr.bf16.mxu0 0
        %2391 = vmatmul.mubr.bf16.gmra.mrb[0].mxu0 %v650
        %v2392 = vpop.f32.mrb[0].mxu0
        %v2393 = vadd.f32 %v2280, %v2392
        %v2394 = vpop.f32.mrb[0].mxu0
        %v2395 = vadd.f32 %v2282, %v2394
        %v2396 = vpop.f32.mrb[0].mxu0
        %v2397 = vadd.f32 %v2284, %v2396
        %v2398 = vpop.f32.mrb[0].mxu0
        %v2399 = vadd.f32 %v2286, %v2398
        %2400 = vmatprep.mubr.bf16.mxu0 0
        %2401 = vmatmul.mubr.bf16.gmra.mrb[0].mxu0 %v653
        %v2402 = vpop.f32.mrb[0].mxu0
        %v2403 = vadd.f32 %v2290, %v2402
        %v2404 = vpop.f32.mrb[0].mxu0
        %v2405 = vadd.f32 %v2292, %v2404
        %v2406 = vpop.f32.mrb[0].mxu0
        %v2407 = vadd.f32 %v2294, %v2406
        %v2408 = vpop.f32.mrb[0].mxu0
        %v2409 = vadd.f32 %v2296, %v2408
        %2410 = vmatprep.mubr.bf16.mxu0 0
        %2411 = vmatmul.mubr.bf16.gmra.mrb[0].mxu0 %v656
        %v2412 = vpop.f32.mrb[0].mxu0
        %v2413 = vadd.f32 %v2300, %v2412
        %v2414 = vpop.f32.mrb[0].mxu0
        %v2415 = vadd.f32 %v2302, %v2414
        %v2416 = vpop.f32.mrb[0].mxu0
        %v2417 = vadd.f32 %v2304, %v2416
        %v2418 = vpop.f32.mrb[0].mxu0
        %v2419 = vadd.f32 %v2306, %v2418
        %2420 = vmatprep.mubr.bf16.mxu0 0
        %2421 = vmatmul.mubr.bf16.gmra.mrb[0].mxu0 %v659
        %v2422 = vpop.f32.mrb[0].mxu0
        %v2423 = vadd.f32 %v2310, %v2422
        %v2424 = vpop.f32.mrb[0].mxu0
        %v2425 = vadd.f32 %v2312, %v2424
        %v2426 = vpop.f32.mrb[0].mxu0
        %v2427 = vadd.f32 %v2314, %v2426
        %v2428 = vpop.f32.mrb[0].mxu0
        %v2429 = vadd.f32 %v2316, %v2428
        %2430 = vdwg.mxu0
        %2431 = vmatprep.subr.bf16.mxu0 0
        %2432 = vmatpush1.bf16.msra.mxu0 %v1423
        %2433 = vmatprep.subr.bf16.mxu0 0
        %2434 = vmatpush1.bf16.msra.mxu0 %v1430
        %2435 = vmatprep.subr.bf16.mxu0 0
        %2436 = vmatpush1.bf16.msra.mxu0 %v1437
        %2437 = vmatprep.subr.bf16.mxu0 0
        %2438 = vmatpush1.bf16.msra.mxu0 %v1444
        %2439 = vmatprep.subr.bf16.mxu0 0
        %2440 = vmatpush1.bf16.msra.mxu0 %v1451
        %2441 = vmatprep.subr.bf16.mxu0 0
        %2442 = vmatpush1.bf16.msra.mxu0 %v1458
        %2443 = vmatprep.subr.bf16.mxu0 0
        %2444 = vmatpush1.bf16.msra.mxu0 %v1465
        %2445 = vmatprep.subr.bf16.mxu0 0
        %2446 = vmatpush1.bf16.msra.mxu0 %v1472
        %2447 = vmatprep.subr.bf16.mxu0 0
        %2448 = vmatpush1.bf16.msra.mxu0 %v1479
        %2449 = vmatprep.subr.bf16.mxu0 0
        %2450 = vmatpush1.bf16.msra.mxu0 %v1486
        %2451 = vmatprep.subr.bf16.mxu0 0
        %2452 = vmatpush1.bf16.msra.mxu0 %v1493
        %2453 = vmatprep.subr.bf16.mxu0 0
        %2454 = vmatpush1.bf16.msra.mxu0 %v1500
        %2455 = vmatprep.subr.bf16.mxu0 0
        %2456 = vmatpush1.bf16.msra.mxu0 %v1507
        %2457 = vmatprep.subr.bf16.mxu0 0
        %2458 = vmatpush1.bf16.msra.mxu0 %v1514
        %2459 = vmatprep.subr.bf16.mxu0 0
        %2460 = vmatpush1.bf16.msra.mxu0 %v1521
        %2461 = vmatprep.subr.bf16.mxu0 0
        %2462 = vmatpush1.bf16.msra.mxu0 %v1528
        %2463 = vmatprep.mubr.bf16.mxu0 %v637
        %2464 = vmatmul.mubr.bf16.gmra.mrb[0].mxu0 %v636
        %v2465 = vpop.f32.mrb[0].mxu0
        %v2466 = vadd.f32 %v881, %v2465
        %v2467 = vpop.f32.mrb[0].mxu0
        %v2468 = vpop.f32.mrb[0].mxu0
        %v2469 = vadd.f32 %v881, %v2468
        %v2470 = vpop.f32.mrb[0].mxu0
        %2471 = vmatprep.mubr.bf16.mxu0 %v640
        %2472 = vmatmul.mubr.bf16.gmra.mrb[0].mxu0 %v639
        %v2473 = vpop.f32.mrb[0].mxu0
        %v2474 = vadd.f32 %v881, %v2473
        %v2475 = vpop.f32.mrb[0].mxu0
        %v2476 = vpop.f32.mrb[0].mxu0
        %v2477 = vadd.f32 %v881, %v2476
        %v2478 = vpop.f32.mrb[0].mxu0
        %2479 = vmatprep.mubr.bf16.mxu0 %v643
        %2480 = vmatmul.mubr.bf16.gmra.mrb[0].mxu0 %v642
        %v2481 = vpop.f32.mrb[0].mxu0
        %v2482 = vadd.f32 %v881, %v2481
        %v2483 = vpop.f32.mrb[0].mxu0
        %v2484 = vpop.f32.mrb[0].mxu0
        %v2485 = vadd.f32 %v881, %v2484
        %v2486 = vpop.f32.mrb[0].mxu0
        %2487 = vmatprep.mubr.bf16.mxu0 %v646
        %2488 = vmatmul.mubr.bf16.gmra.mrb[0].mxu0 %v645
        %v2489 = vpop.f32.mrb[0].mxu0
        %v2490 = vadd.f32 %v881, %v2489
        %v2491 = vpop.f32.mrb[0].mxu0
        %v2492 = vpop.f32.mrb[0].mxu0
        %v2493 = vadd.f32 %v881, %v2492
        %v2494 = vpop.f32.mrb[0].mxu0
        %2495 = vmatprep.mubr.bf16.mxu0 %v649
        %2496 = vmatmul.mubr.bf16.gmra.mrb[0].mxu0 %v648
        %v2497 = vpop.f32.mrb[0].mxu0
        %v2498 = vadd.f32 %v881, %v2497
        %v2499 = vpop.f32.mrb[0].mxu0
        %v2500 = vpop.f32.mrb[0].mxu0
        %v2501 = vadd.f32 %v881, %v2500
        %v2502 = vpop.f32.mrb[0].mxu0
        %2503 = vmatprep.mubr.bf16.mxu0 %v652
        %2504 = vmatmul.mubr.bf16.gmra.mrb[0].mxu0 %v651
        %v2505 = vpop.f32.mrb[0].mxu0
        %v2506 = vadd.f32 %v881, %v2505
        %v2507 = vpop.f32.mrb[0].mxu0
        %v2508 = vpop.f32.mrb[0].mxu0
        %v2509 = vadd.f32 %v881, %v2508
        %v2510 = vpop.f32.mrb[0].mxu0
        %2511 = vmatprep.mubr.bf16.mxu0 %v655
        %2512 = vmatmul.mubr.bf16.gmra.mrb[0].mxu0 %v654
        %v2513 = vpop.f32.mrb[0].mxu0
        %v2514 = vadd.f32 %v881, %v2513
        %v2515 = vpop.f32.mrb[0].mxu0
        %v2516 = vpop.f32.mrb[0].mxu0
        %v2517 = vadd.f32 %v881, %v2516
        %v2518 = vpop.f32.mrb[0].mxu0
        %2519 = vmatprep.mubr.bf16.mxu0 %v658
        %2520 = vmatmul.mubr.bf16.gmra.mrb[0].mxu0 %v657
        %v2521 = vpop.f32.mrb[0].mxu0
        %v2522 = vadd.f32 %v881, %v2521
        %v2523 = vpop.f32.mrb[0].mxu0
        %v2524 = vpop.f32.mrb[0].mxu0
        %v2525 = vadd.f32 %v881, %v2524
        %v2526 = vpop.f32.mrb[0].mxu0
        %2527 = vdwg.mxu0
        %2528 = vmatprep.subr.bf16.mxu0 0
        %2529 = vmatpush1.bf16.msra.mxu0 %v1535
        %2530 = vmatprep.subr.bf16.mxu0 0
        %2531 = vmatpush1.bf16.msra.mxu0 %v1542
        %2532 = vmatprep.subr.bf16.mxu0 0
        %2533 = vmatpush1.bf16.msra.mxu0 %v1549
        %2534 = vmatprep.subr.bf16.mxu0 0
        %2535 = vmatpush1.bf16.msra.mxu0 %v1556
        %2536 = vmatprep.subr.bf16.mxu0 0
        %2537 = vmatpush1.bf16.msra.mxu0 %v1563
        %2538 = vmatprep.subr.bf16.mxu0 0
        %2539 = vmatpush1.bf16.msra.mxu0 %v1570
        %2540 = vmatprep.subr.bf16.mxu0 0
        %2541 = vmatpush1.bf16.msra.mxu0 %v1577
        %2542 = vmatprep.subr.bf16.mxu0 0
        %2543 = vmatpush1.bf16.msra.mxu0 %v1584
        %2544 = vmatprep.subr.bf16.mxu0 0
        %2545 = vmatpush1.bf16.msra.mxu0 0
        %2546 = vmatprep.subr.bf16.mxu0 0
        %2547 = vmatpush1.bf16.msra.mxu0 0
        %2548 = vmatprep.subr.bf16.mxu0 0
        %2549 = vmatpush1.bf16.msra.mxu0 0
        %2550 = vmatprep.subr.bf16.mxu0 0
        %2551 = vmatpush1.bf16.msra.mxu0 0
        %2552 = vmatprep.subr.bf16.mxu0 0
        %2553 = vmatpush1.bf16.msra.mxu0 0
        %2554 = vmatprep.subr.bf16.mxu0 0
        %2555 = vmatpush1.bf16.msra.mxu0 0
        %2556 = vmatprep.subr.bf16.mxu0 0
        %2557 = vmatpush1.bf16.msra.mxu0 0
        %2558 = vmatprep.subr.bf16.mxu0 0
        %2559 = vmatpush1.bf16.msra.mxu0 0
        %2560 = vmatprep.mubr.bf16.mxu0 0
        %2561 = vmatmul.mubr.bf16.gmra.mrb[0].mxu0 %v638
        %v2562 = vpop.f32.mrb[0].mxu0
        %v2563 = vadd.f32 %v2466, %v2562
        %v2564 = vpop.f32.mrb[0].mxu0
        %v2565 = vpop.f32.mrb[0].mxu0
        %v2566 = vadd.f32 %v2469, %v2565
        %v2567 = vpop.f32.mrb[0].mxu0
        %2568 = vmatprep.mubr.bf16.mxu0 0
        %2569 = vmatmul.mubr.bf16.gmra.mrb[0].mxu0 %v641
        %v2570 = vpop.f32.mrb[0].mxu0
        %v2571 = vadd.f32 %v2474, %v2570
        %v2572 = vpop.f32.mrb[0].mxu0
        %v2573 = vpop.f32.mrb[0].mxu0
        %v2574 = vadd.f32 %v2477, %v2573
        %v2575 = vpop.f32.mrb[0].mxu0
        %2576 = vmatprep.mubr.bf16.mxu0 0
        %2577 = vmatmul.mubr.bf16.gmra.mrb[0].mxu0 %v644
        %v2578 = vpop.f32.mrb[0].mxu0
        %v2579 = vadd.f32 %v2482, %v2578
        %v2580 = vpop.f32.mrb[0].mxu0
        %v2581 = vpop.f32.mrb[0].mxu0
        %v2582 = vadd.f32 %v2485, %v2581
        %v2583 = vpop.f32.mrb[0].mxu0
        %2584 = vmatprep.mubr.bf16.mxu0 0
        %2585 = vmatmul.mubr.bf16.gmra.mrb[0].mxu0 %v647
        %v2586 = vpop.f32.mrb[0].mxu0
        %v2587 = vadd.f32 %v2490, %v2586
        %v2588 = vpop.f32.mrb[0].mxu0
        %v2589 = vpop.f32.mrb[0].mxu0
        %v2590 = vadd.f32 %v2493, %v2589
        %v2591 = vpop.f32.mrb[0].mxu0
        %2592 = vmatprep.mubr.bf16.mxu0 0
        %2593 = vmatmul.mubr.bf16.gmra.mrb[0].mxu0 %v650
        %v2594 = vpop.f32.mrb[0].mxu0
        %v2595 = vadd.f32 %v2498, %v2594
        %v2596 = vpop.f32.mrb[0].mxu0
        %v2597 = vpop.f32.mrb[0].mxu0
        %v2598 = vadd.f32 %v2501, %v2597
        %v2599 = vpop.f32.mrb[0].mxu0
        %2600 = vmatprep.mubr.bf16.mxu0 0
        %2601 = vmatmul.mubr.bf16.gmra.mrb[0].mxu0 %v653
        %v2602 = vpop.f32.mrb[0].mxu0
        %v2603 = vadd.f32 %v2506, %v2602
        %v2604 = vpop.f32.mrb[0].mxu0
        %v2605 = vpop.f32.mrb[0].mxu0
        %v2606 = vadd.f32 %v2509, %v2605
        %v2607 = vpop.f32.mrb[0].mxu0
        %2608 = vmatprep.mubr.bf16.mxu0 0
        %2609 = vmatmul.mubr.bf16.gmra.mrb[0].mxu0 %v656
        %v2610 = vpop.f32.mrb[0].mxu0
        %v2611 = vadd.f32 %v2514, %v2610
        %v2612 = vpop.f32.mrb[0].mxu0
        %v2613 = vpop.f32.mrb[0].mxu0
        %v2614 = vadd.f32 %v2517, %v2613
        %v2615 = vpop.f32.mrb[0].mxu0
        %2616 = vmatprep.mubr.bf16.mxu0 0
        %2617 = vmatmul.mubr.bf16.gmra.mrb[0].mxu0 %v659
        %v2618 = vpop.f32.mrb[0].mxu0
        %v2619 = vadd.f32 %v2522, %v2618
        %v2620 = vpop.f32.mrb[0].mxu0
        %v2621 = vpop.f32.mrb[0].mxu0
        %v2622 = vadd.f32 %v2525, %v2621
        %v2623 = vpop.f32.mrb[0].mxu0
        %2624 = vdwg.mxu0
        %v2625 = vpack.c.bf16 %v1905, %v1901
        %v2626 = vpack.c.bf16 %v1907, %v1903
        %v2627 = vpack.c.bf16 %v2131, %v2127
        %v2628 = vpack.c.bf16 %v2133, %v2129
        %v2629 = vpack.c.bf16 %v2357, %v2353
        %v2630 = vpack.c.bf16 %v2359, %v2355
        %v2631 = vpack.c.bf16 %v2566, %v2563
        %v2632 = vpack.c.bf16 %v1915, %v1911
        %v2633 = vpack.c.bf16 %v1917, %v1913
        %v2634 = vpack.c.bf16 %v2141, %v2137
        %v2635 = vpack.c.bf16 %v2143, %v2139
        %v2636 = vpack.c.bf16 %v2367, %v2363
        %v2637 = vpack.c.bf16 %v2369, %v2365
        %v2638 = vpack.c.bf16 %v2574, %v2571
        %v2639 = vpack.c.bf16 %v1925, %v1921
        %v2640 = vpack.c.bf16 %v1927, %v1923
        %v2641 = vpack.c.bf16 %v2151, %v2147
        %v2642 = vpack.c.bf16 %v2153, %v2149
        %v2643 = vpack.c.bf16 %v2377, %v2373
        %v2644 = vpack.c.bf16 %v2379, %v2375
        %v2645 = vpack.c.bf16 %v2582, %v2579
        %v2646 = vpack.c.bf16 %v1935, %v1931
        %v2647 = vpack.c.bf16 %v1937, %v1933
        %v2648 = vpack.c.bf16 %v2161, %v2157
        %v2649 = vpack.c.bf16 %v2163, %v2159
        %v2650 = vpack.c.bf16 %v2387, %v2383
        %v2651 = vpack.c.bf16 %v2389, %v2385
        %v2652 = vpack.c.bf16 %v2590, %v2587
        %v2653 = vpack.c.bf16 %v1945, %v1941
        %v2654 = vpack.c.bf16 %v1947, %v1943
        %v2655 = vpack.c.bf16 %v2171, %v2167
        %v2656 = vpack.c.bf16 %v2173, %v2169
        %v2657 = vpack.c.bf16 %v2397, %v2393
        %v2658 = vpack.c.bf16 %v2399, %v2395
        %v2659 = vpack.c.bf16 %v2598, %v2595
        %v2660 = vpack.c.bf16 %v1955, %v1951
        %v2661 = vpack.c.bf16 %v1957, %v1953
        %v2662 = vpack.c.bf16 %v2181, %v2177
        %v2663 = vpack.c.bf16 %v2183, %v2179
        %v2664 = vpack.c.bf16 %v2407, %v2403
        %v2665 = vpack.c.bf16 %v2409, %v2405
        %v2666 = vpack.c.bf16 %v2606, %v2603
        %v2667 = vpack.c.bf16 %v1965, %v1961
        %v2668 = vpack.c.bf16 %v1967, %v1963
        %v2669 = vpack.c.bf16 %v2191, %v2187
        %v2670 = vpack.c.bf16 %v2193, %v2189
        %v2671 = vpack.c.bf16 %v2417, %v2413
        %v2672 = vpack.c.bf16 %v2419, %v2415
        %v2673 = vpack.c.bf16 %v2614, %v2611
        %v2674 = vpack.c.bf16 %v1975, %v1971
        %v2675 = vpack.c.bf16 %v1977, %v1973
        %v2676 = vpack.c.bf16 %v2201, %v2197
        %v2677 = vpack.c.bf16 %v2203, %v2199
        %v2678 = vpack.c.bf16 %v2427, %v2423
        %v2679 = vpack.c.bf16 %v2429, %v2425
        %v2680 = vpack.c.bf16 %v2622, %v2619
        %v2737 = vunpack.c.l.b16 %v2625
        %v2738 = vunpack.c.l.b16 %v2626
        %v2739 = vunpack.c.l.b16 %v2627
        %v2740 = vunpack.c.l.b16 %v2628
        %v2741 = vunpack.c.l.b16 %v2629
        %v2742 = vunpack.c.l.b16 %v2630
        %v2743 = vunpack.c.l.b16 %v2631
        %v2744 = vunpack.c.h.b16 %v2625
        %v2745 = vunpack.c.h.b16 %v2626
        %v2746 = vunpack.c.h.b16 %v2627
        %v2747 = vunpack.c.h.b16 %v2628
        %v2748 = vunpack.c.h.b16 %v2629
        %v2749 = vunpack.c.h.b16 %v2630
        %v2750 = vunpack.c.h.b16 %v2631
        %v2751 = vunpack.c.l.b16 %v2632
        %v2752 = vunpack.c.l.b16 %v2633
        %v2753 = vunpack.c.l.b16 %v2634
        %v2754 = vunpack.c.l.b16 %v2635
        %v2755 = vunpack.c.l.b16 %v2636
        %v2756 = vunpack.c.l.b16 %v2637
        %v2757 = vunpack.c.l.b16 %v2638
        %v2758 = vunpack.c.h.b16 %v2632
        %v2759 = vunpack.c.h.b16 %v2633
        %v2760 = vunpack.c.h.b16 %v2634
        %v2761 = vunpack.c.h.b16 %v2635
        %v2762 = vunpack.c.h.b16 %v2636
        %v2763 = vunpack.c.h.b16 %v2637
        %v2764 = vunpack.c.h.b16 %v2638
        %v2765 = vunpack.c.l.b16 %v2639
        %v2766 = vunpack.c.l.b16 %v2640
        %v2767 = vunpack.c.l.b16 %v2641
        %v2768 = vunpack.c.l.b16 %v2642
        %v2769 = vunpack.c.l.b16 %v2643
        %v2770 = vunpack.c.l.b16 %v2644
        %v2771 = vunpack.c.l.b16 %v2645
        %v2772 = vunpack.c.h.b16 %v2639
        %v2773 = vunpack.c.h.b16 %v2640
        %v2774 = vunpack.c.h.b16 %v2641
        %v2775 = vunpack.c.h.b16 %v2642
        %v2776 = vunpack.c.h.b16 %v2643
        %v2777 = vunpack.c.h.b16 %v2644
        %v2778 = vunpack.c.h.b16 %v2645
        %v2779 = vunpack.c.l.b16 %v2646
        %v2780 = vunpack.c.l.b16 %v2647
        %v2781 = vunpack.c.l.b16 %v2648
        %v2782 = vunpack.c.l.b16 %v2649
        %v2783 = vunpack.c.l.b16 %v2650
        %v2784 = vunpack.c.l.b16 %v2651
        %v2785 = vunpack.c.l.b16 %v2652
        %v2786 = vunpack.c.h.b16 %v2646
        %v2787 = vunpack.c.h.b16 %v2647
        %v2788 = vunpack.c.h.b16 %v2648
        %v2789 = vunpack.c.h.b16 %v2649
        %v2790 = vunpack.c.h.b16 %v2650
        %v2791 = vunpack.c.h.b16 %v2651
        %v2792 = vunpack.c.h.b16 %v2652
        %v2793 = vunpack.c.l.b16 %v2653
        %v2794 = vunpack.c.l.b16 %v2654
        %v2795 = vunpack.c.l.b16 %v2655
        %v2796 = vunpack.c.l.b16 %v2656
        %v2797 = vunpack.c.l.b16 %v2657
        %v2798 = vunpack.c.l.b16 %v2658
        %v2799 = vunpack.c.l.b16 %v2659
        %v2800 = vunpack.c.h.b16 %v2653
        %v2801 = vunpack.c.h.b16 %v2654
        %v2802 = vunpack.c.h.b16 %v2655
        %v2803 = vunpack.c.h.b16 %v2656
        %v2804 = vunpack.c.h.b16 %v2657
        %v2805 = vunpack.c.h.b16 %v2658
        %v2806 = vunpack.c.h.b16 %v2659
        %v2807 = vunpack.c.l.b16 %v2660
        %v2808 = vunpack.c.l.b16 %v2661
        %v2809 = vunpack.c.l.b16 %v2662
        %v2810 = vunpack.c.l.b16 %v2663
        %v2811 = vunpack.c.l.b16 %v2664
        %v2812 = vunpack.c.l.b16 %v2665
        %v2813 = vunpack.c.l.b16 %v2666
        %v2814 = vunpack.c.h.b16 %v2660
        %v2815 = vunpack.c.h.b16 %v2661
        %v2816 = vunpack.c.h.b16 %v2662
        %v2817 = vunpack.c.h.b16 %v2663
        %v2818 = vunpack.c.h.b16 %v2664
        %v2819 = vunpack.c.h.b16 %v2665
        %v2820 = vunpack.c.h.b16 %v2666
        %v2821 = vunpack.c.l.b16 %v2667
        %v2822 = vunpack.c.l.b16 %v2668
        %v2823 = vunpack.c.l.b16 %v2669
        %v2824 = vunpack.c.l.b16 %v2670
        %v2825 = vunpack.c.l.b16 %v2671
        %v2826 = vunpack.c.l.b16 %v2672
        %v2827 = vunpack.c.l.b16 %v2673
        %v2828 = vunpack.c.h.b16 %v2667
        %v2829 = vunpack.c.h.b16 %v2668
        %v2830 = vunpack.c.h.b16 %v2669
        %v2831 = vunpack.c.h.b16 %v2670
        %v2832 = vunpack.c.h.b16 %v2671
        %v2833 = vunpack.c.h.b16 %v2672
        %v2834 = vunpack.c.h.b16 %v2673
        %v2835 = vunpack.c.l.b16 %v2674
        %v2836 = vunpack.c.l.b16 %v2675
        %v2837 = vunpack.c.l.b16 %v2676
        %v2838 = vunpack.c.l.b16 %v2677
        %v2839 = vunpack.c.l.b16 %v2678
        %v2840 = vunpack.c.l.b16 %v2679
        %v2841 = vunpack.c.l.b16 %v2680
        %v2842 = vunpack.c.h.b16 %v2674
        %v2843 = vunpack.c.h.b16 %v2675
        %v2844 = vunpack.c.h.b16 %v2676
        %v2845 = vunpack.c.h.b16 %v2677
        %v2846 = vunpack.c.h.b16 %v2678
        %v2847 = vunpack.c.h.b16 %v2679
        %v2848 = vunpack.c.h.b16 %v2680
        %v2849 = vpack.c.b16 %v2738, %v2737
        %v2850 = vpack.c.b16 %v2740, %v2739
        %v2851 = vpack.c.b16 %v2742, %v2741
        %v2852 = vpack.c.b16 %v2743, %v2743
        %v2853 = vpack.c.b16 %v2745, %v2744
        %v2854 = vpack.c.b16 %v2747, %v2746
        %v2855 = vpack.c.b16 %v2749, %v2748
        %v2856 = vpack.c.b16 %v2750, %v2750
        %v2857 = vpack.c.b16 %v2752, %v2751
        %v2858 = vpack.c.b16 %v2754, %v2753
        %v2859 = vpack.c.b16 %v2756, %v2755
        %v2860 = vpack.c.b16 %v2757, %v2757
        %v2861 = vpack.c.b16 %v2759, %v2758
        %v2862 = vpack.c.b16 %v2761, %v2760
        %v2863 = vpack.c.b16 %v2763, %v2762
        %v2864 = vpack.c.b16 %v2764, %v2764
        %v2865 = vpack.c.b16 %v2766, %v2765
        %v2866 = vpack.c.b16 %v2768, %v2767
        %v2867 = vpack.c.b16 %v2770, %v2769
        %v2868 = vpack.c.b16 %v2771, %v2771
        %v2869 = vpack.c.b16 %v2773, %v2772
        %v2870 = vpack.c.b16 %v2775, %v2774
        %v2871 = vpack.c.b16 %v2777, %v2776
        %v2872 = vpack.c.b16 %v2778, %v2778
        %v2873 = vpack.c.b16 %v2780, %v2779
        %v2874 = vpack.c.b16 %v2782, %v2781
        %v2875 = vpack.c.b16 %v2784, %v2783
        %v2876 = vpack.c.b16 %v2785, %v2785
        %v2877 = vpack.c.b16 %v2787, %v2786
        %v2878 = vpack.c.b16 %v2789, %v2788
        %v2879 = vpack.c.b16 %v2791, %v2790
        %v2880 = vpack.c.b16 %v2792, %v2792
        %v2881 = vpack.c.b16 %v2794, %v2793
        %v2882 = vpack.c.b16 %v2796, %v2795
        %v2883 = vpack.c.b16 %v2798, %v2797
        %v2884 = vpack.c.b16 %v2799, %v2799
        %v2885 = vpack.c.b16 %v2801, %v2800
        %v2886 = vpack.c.b16 %v2803, %v2802
        %v2887 = vpack.c.b16 %v2805, %v2804
        %v2888 = vpack.c.b16 %v2806, %v2806
        %v2889 = vpack.c.b16 %v2808, %v2807
        %v2890 = vpack.c.b16 %v2810, %v2809
        %v2891 = vpack.c.b16 %v2812, %v2811
        %v2892 = vpack.c.b16 %v2813, %v2813
        %v2893 = vpack.c.b16 %v2815, %v2814
        %v2894 = vpack.c.b16 %v2817, %v2816
        %v2895 = vpack.c.b16 %v2819, %v2818
        %v2896 = vpack.c.b16 %v2820, %v2820
        %v2897 = vpack.c.b16 %v2822, %v2821
        %v2898 = vpack.c.b16 %v2824, %v2823
        %v2899 = vpack.c.b16 %v2826, %v2825
        %v2900 = vpack.c.b16 %v2827, %v2827
        %v2901 = vpack.c.b16 %v2829, %v2828
        %v2902 = vpack.c.b16 %v2831, %v2830
        %v2903 = vpack.c.b16 %v2833, %v2832
        %v2904 = vpack.c.b16 %v2834, %v2834
        %v2905 = vpack.c.b16 %v2836, %v2835
        %v2906 = vpack.c.b16 %v2838, %v2837
        %v2907 = vpack.c.b16 %v2840, %v2839
        %v2908 = vpack.c.b16 %v2841, %v2841
        %v2909 = vpack.c.b16 %v2843, %v2842
        %v2910 = vpack.c.b16 %v2845, %v2844
        %v2911 = vpack.c.b16 %v2847, %v2846
        %v2912 = vpack.c.b16 %v2848, %v2848
        %2977 = vst [vmem:[%s230] sm:$0xff] %v2849
        %2978 = vst [vmem:[%s230 + $0x8] sm:$0xff] %v2850
        %2979 = vst [vmem:[%s230 + $0x10] sm:$0xff] %v2851
        %vm2980 = vcmask 125952
        %2981 = vst.msk [vmem:[%s230 + $0x18] sm:$0xf] %vm2980, %v2852
        %2982 = vst [vmem:[%s230 + $0x1c] sm:$0xff] %v2853
        %2983 = vst [vmem:[%s230 + $0x24] sm:$0xff] %v2854
        %2984 = vst [vmem:[%s230 + $0x2c] sm:$0xff] %v2855
        %2985 = vst.msk [vmem:[%s230 + $0x34] sm:$0xf] %vm2980, %v2856
        %2986 = vst [vmem:[%s230 + $0x38] sm:$0xff] %v2857
        %2987 = vst [vmem:[%s230 + $0x40] sm:$0xff] %v2858
        %2988 = vst [vmem:[%s230 + $0x48] sm:$0xff] %v2859
        %2989 = vst.msk [vmem:[%s230 + $0x50] sm:$0xf] %vm2980, %v2860
        %2990 = vst [vmem:[%s230 + $0x54] sm:$0xff] %v2861
        %2991 = vst [vmem:[%s230 + $0x5c] sm:$0xff] %v2862
        %2992 = vst [vmem:[%s230 + $0x64] sm:$0xff] %v2863
        %2993 = vst.msk [vmem:[%s230 + $0x6c] sm:$0xf] %vm2980, %v2864
        %2994 = vst [vmem:[%s230 + $0x70] sm:$0xff] %v2865
        %2995 = vst [vmem:[%s230 + $0x78] sm:$0xff] %v2866
        %2996 = vst [vmem:[%s230 + $0x80] sm:$0xff] %v2867
        %2997 = vst.msk [vmem:[%s230 + $0x88] sm:$0xf] %vm2980, %v2868
        %2998 = vst [vmem:[%s230 + $0x8c] sm:$0xff] %v2869
        %2999 = vst [vmem:[%s230 + $0x94] sm:$0xff] %v2870
        %3000 = vst [vmem:[%s230 + $0x9c] sm:$0xff] %v2871
        %3001 = vst.msk [vmem:[%s230 + $0xa4] sm:$0xf] %vm2980, %v2872
        %3002 = vst [vmem:[%s230 + $0xa8] sm:$0xff] %v2873
        %3003 = vst [vmem:[%s230 + $0xb0] sm:$0xff] %v2874
        %3004 = vst [vmem:[%s230 + $0xb8] sm:$0xff] %v2875
        %3005 = vst.msk [vmem:[%s230 + $0xc0] sm:$0xf] %vm2980, %v2876
        %3006 = vst [vmem:[%s230 + $0xc4] sm:$0xff] %v2877
        %3007 = vst [vmem:[%s230 + $0xcc] sm:$0xff] %v2878
        %3008 = vst [vmem:[%s230 + $0xd4] sm:$0xff] %v2879
        %3009 = vst.msk [vmem:[%s230 + $0xdc] sm:$0xf] %vm2980, %v2880
        %3010 = vst [vmem:[%s230 + $0xe0] sm:$0xff] %v2881
        %3011 = vst [vmem:[%s230 + $0xe8] sm:$0xff] %v2882
        %3012 = vst [vmem:[%s230 + $0xf0] sm:$0xff] %v2883
        %3013 = vst.msk [vmem:[%s230 + $0xf8] sm:$0xf] %vm2980, %v2884
        %3014 = vst [vmem:[%s230 + $0xfc] sm:$0xff] %v2885
        %3015 = vst [vmem:[%s230 + $0x104] sm:$0xff] %v2886
        %3016 = vst [vmem:[%s230 + $0x10c] sm:$0xff] %v2887
        %3017 = vst.msk [vmem:[%s230 + $0x114] sm:$0xf] %vm2980, %v2888
        %3018 = vst [vmem:[%s230 + $0x118] sm:$0xff] %v2889
        %3019 = vst [vmem:[%s230 + $0x120] sm:$0xff] %v2890
        %3020 = vst [vmem:[%s230 + $0x128] sm:$0xff] %v2891
        %3021 = vst.msk [vmem:[%s230 + $0x130] sm:$0xf] %vm2980, %v2892
        %3022 = vst [vmem:[%s230 + $0x134] sm:$0xff] %v2893
        %3023 = vst [vmem:[%s230 + $0x13c] sm:$0xff] %v2894
        %3024 = vst [vmem:[%s230 + $0x144] sm:$0xff] %v2895
        %3025 = vst.msk [vmem:[%s230 + $0x14c] sm:$0xf] %vm2980, %v2896
        %3026 = vst [vmem:[%s230 + $0x150] sm:$0xff] %v2897
        %3027 = vst [vmem:[%s230 + $0x158] sm:$0xff] %v2898
        %3028 = vst [vmem:[%s230 + $0x160] sm:$0xff] %v2899
        %3029 = vst.msk [vmem:[%s230 + $0x168] sm:$0xf] %vm2980, %v2900
        %3030 = vst [vmem:[%s230 + $0x16c] sm:$0xff] %v2901
        %3031 = vst [vmem:[%s230 + $0x174] sm:$0xff] %v2902
        %3032 = vst [vmem:[%s230 + $0x17c] sm:$0xff] %v2903
        %3033 = vst.msk [vmem:[%s230 + $0x184] sm:$0xf] %vm2980, %v2904
        %3034 = vst [vmem:[%s230 + $0x188] sm:$0xff] %v2905
        %3035 = vst [vmem:[%s230 + $0x190] sm:$0xff] %v2906
        %3036 = vst [vmem:[%s230 + $0x198] sm:$0xff] %v2907
        %3037 = vst.msk [vmem:[%s230 + $0x1a0] sm:$0xf] %vm2980, %v2908
        %3038 = vst [vmem:[%s230 + $0x1a4] sm:$0xff] %v2909
        %3039 = vst [vmem:[%s230 + $0x1ac] sm:$0xff] %v2910
        %3040 = vst [vmem:[%s230 + $0x1b4] sm:$0xff] %v2911
        %3041 = vst.msk [vmem:[%s230 + $0x1bc] sm:$0xf] %vm2980, %v2912
        %s3042 = sand.u32 %s137, 1
        %s3043 = scalar_lea.sflag [#allocation3], %s3042
        %s3044 = sand.u32 %s137, 1
        %s3045 = smul.addr %s3044, 448
        %s3046 = scalar_lea.vmem [#allocation2], %s3045
        // Predicated region
        $region41: #{decoder_forward.1} parent=39 // pred_check
          %p3047 = pneg %p147
        $region42: #{decoder_forward.1} parent=39 // pred_check_branch
          %3049 = sbr.rel (%p3047) target = $region44
        $region43: #{decoder_forward.1} parent=39 // pred_region
          %s3050 = smul.u32 16, %s19
          %s3051 = ssub.s32 25, %s3050
          %p3052 = scmp.lt.s32.totalorder %s3051, 16
          %s3053 = scalar_select %p3052, %s3051, 16
          %s3054 = smul.u32 64, %s3053
          %s3055 = smul.u32 %s3054, 7
          %s3057 = ssub.s32 7168, %s3055
          %3058 = vsyncadd %s3043, %s3057
          %p3059 = scmp.ne.s32.totalorder 0, %s3055
          %s3060 = smul.addr %s3050, 7
          %s3061 = smul.addr %s3060, 64
          %s3062 = scalar_lea.hbm %s5, %s3061
          %s3063 = smul.u32 28, %s3053
          %s3064 = sshll.u32 %s3046, 4
          %s3065 = int_to_ptr.vmem [resolvable:$true] %s3064
          %s3066 = sshll.u32 %s3063, 4
          %3070 = dma.vmem_to_hbm [thread:$0]  (%p3059), %s3065, %s3066, %s3062, %s3043, 448, 448, 28
        $region44: #{decoder_forward.1} parent=39 // pred_fallthru
          _
      $region40: #{decoder_forward.1} parent=5 // pred_fallthru
        _
      %p3071 = scmp.le.s32.totalorder 2, %s14
      // Predicated region
      $region45: #{decoder_forward.1} parent=5 // pred_check
        %p3072 = pneg %p3071
      $region46: #{decoder_forward.1} parent=5 // pred_check_branch
        %3074 = sbr.rel (%p3072) target = $region48
      $region47: #{decoder_forward.1} parent=5 // pred_region
        %s3075 = ssub.s32 %s14, 2
        // Predicated region
        $region49: #{decoder_forward.1} parent=47 // pred_check
          %p3076 = pneg %p153
        $region50: #{decoder_forward.1} parent=47 // pred_check_branch
          %3078 = sbr.rel (%p3076) target = $region52
        $region51: #{decoder_forward.1} parent=47 // pred_region
          %s3079 = sand.u32 %s138, 1
          %s3080 = scalar_lea.sflag [#allocation3], %s3079
          %s3081 = sand.u32 %s138, 1
          %s3082 = smul.addr %s3081, 448
          %s3083 = scalar_lea.vmem [#allocation2], %s3082
          %3084 = dma.done %s3080, 7168
        $region52: #{decoder_forward.1} parent=47 // pred_fallthru
          _
      $region48: #{decoder_forward.1} parent=5 // pred_fallthru
        _
    $region6: #{decoder_forward.1} parent=1 // loop_footer
      %s18 = sadd.s32 1, %s14
    $region7: #{decoder_forward.1} parent=1 // loop_footer_branch
      %13 = sbr.rel target = $region3
    $region8: #{decoder_forward.1} parent=1 // loop_exit
      _
    %3085 = vsyncpa [#allocation3], 1
    %s3086 = scalar_lea.sflag [#allocation3], 1
    %3087 = vsyncpa %s3086, 1

</llo_original>
